<compile_context>
chip_gen: v7x
topology: tpu7x:2x2x1
jax: 0.10.0
libtpu: 0.0.40
codegen_flags: <defaults>
</compile_context>

<pallas_src>
import functools

import jax
import jax.numpy as jnp
from jax.experimental import pallas as pl
from jax.experimental.pallas import tpu as pltpu


def _round_up(x, m):
    return ((x + m - 1) // m) * m


@functools.lru_cache(maxsize=None)
def _single_buffer_supported():
    """Feature-detect pipeline_mode=pl.Buffered(1) once via a tiny probe compile.

    The except is scoped to this probe only, so genuine lowering errors in the
    real kernel are never swallowed.
    """
    if not hasattr(pl, "Buffered"):
        return False

    def _probe(a_ref, o_ref):
        o_ref[...] = a_ref[...] * 2.0

    try:
        probe = pl.pallas_call(
            _probe,
            out_shape=jax.ShapeDtypeStruct((8, 128), jnp.float32),
            grid_spec=pltpu.PrefetchScalarGridSpec(
                num_scalar_prefetch=0,
                grid=(1,),
                in_specs=[pl.BlockSpec((8, 128), lambda i: (0, 0),
                                       pipeline_mode=pl.Buffered(1))],
                out_specs=pl.BlockSpec((8, 128), lambda i: (0, 0)),
            ),
        )
        jax.jit(probe).lower(
            jax.ShapeDtypeStruct((8, 128), jnp.float32)).compile()
        return True
    except Exception:
        return False


def _vmem_capacity_bytes():
    try:
        return int(pltpu.get_tpu_info().vmem_capacity_bytes)
    except Exception:
        return 128 * 1024 * 1024  # v5e / v6e physical VMEM


def _estimate_vmem(tm, d_in, tk, x_isz, c_isz, o_isz, w_bufs):
    """Rough per-core VMEM footprint of one pipelined configuration."""
    return (
        2 * tm * d_in * x_isz              # double-buffered x tile
        + 2 * tm * d_in * o_isz            # double-buffered output tile
        + w_bufs * 2 * d_in * tk * c_isz   # W1 (d_in, tk) + W2 (tk, d_in) blocks
        + w_bufs * tk * 4                  # b1 block (f32)
        + 3 * d_in * 4                     # b2 / gamma / beta
        + tm * d_in * 4                    # f32 accumulator scratch
        + tm * tk * (4 + c_isz)            # (tm, tk) hidden intermediate
        + 2 * tm * d_in * 4                # LayerNorm epilogue temporaries
    )


def ffn_kernel(x_ref, w1_ref, b1_ref, w2_ref, b2_ref, gamma_ref, beta_ref,
               o_ref, acc_ref):
    k = pl.program_id(1)
    nk = pl.num_programs(1)

    # One d_hid chunk: partial y_k = relu(x @ W1_k + b1_k) @ W2_k (f32 MXU acc).
    xc = x_ref[...].astype(w1_ref.dtype)
    h = jnp.dot(xc, w1_ref[...], preferred_element_type=jnp.float32) + b1_ref[...]
    h = jnp.maximum(h, 0.0)
    y_part = jnp.dot(h.astype(w2_ref.dtype), w2_ref[...],
                     preferred_element_type=jnp.float32)

    @pl.when(k == 0)
    def _():
        acc_ref[...] = y_part

    @pl.when(k > 0)
    def _():
        acc_ref[...] = acc_ref[...] + y_part

    # TODO(synk): dropout is identity here (inference mode); training-mode
    # dropout would draw a keep-mask via pltpu.prng_seed / pltpu.prng_random_bits.

    @pl.when(k == nk - 1)
    def _():
        # Residual add in the original (full) precision, then LayerNorm eps=1e-6.
        y = acc_ref[...] + b2_ref[...] + x_ref[...].astype(jnp.float32)
        # Fused LayerNorm statistics: sum and sum-of-squares in one pass.
        inv_d = 1.0 / y.shape[-1]
        s1 = jnp.sum(y, axis=-1, keepdims=True)
        s2 = jnp.sum(y * y, axis=-1, keepdims=True)
        mean = s1 * inv_d
        var = s2 * inv_d - mean * mean
        y_hat = (y - mean) * jax.lax.rsqrt(var + 1e-6)
        # Note: zero-padded token rows get var=0 -> output == beta; those rows
        # are sliced off in the wrapper and never observed.
        o_ref[...] = (y_hat * gamma_ref[...] + beta_ref[...]).astype(o_ref.dtype)


def _param_spec(shape, index_map, *, single_buffer):
    if single_buffer and _single_buffer_supported():
        # Grid-invariant block: one buffer is enough (never re-fetched).
        return pl.BlockSpec(shape, index_map, pipeline_mode=pl.Buffered(1))
    return pl.BlockSpec(shape, index_map)


def _choose_tk(tm, d_in, d_hid, x_isz, c_isz, o_isz, budget, max_chunk,
               single_buffer_ok):
    """Largest d_hid chunk whose VMEM footprint fits the budget."""
    cap = d_hid if max_chunk is None else max(128, min(d_hid, int(max_chunk)))
    if cap >= d_hid:
        w_bufs = 1 if single_buffer_ok else 2
        if _estimate_vmem(tm, d_in, d_hid, x_isz, c_isz, o_isz, w_bufs) <= budget:
            return d_hid                 # weights fully resident, single k step
    tk = max(128, (min(cap, d_hid) // 128) * 128)
    while tk > 128 and _estimate_vmem(tm, d_in, tk, x_isz, c_isz, o_isz, 2) > budget:
        tk -= 128
    return tk


def positionwise_feed_forward(x, w1, b1, w2, b2, gamma, beta, *,
                              tm=512, compute_dtype=jnp.bfloat16,
                              out_dtype=None, max_hidden_chunk=None):
    """x: (B, S, d_in). w1: (d_in, d_hid), w2: (d_hid, d_in) (pre-transposed)."""
    B, S, d_in = x.shape
    d_hid = w1.shape[1]
    N = B * S
    out_dtype = x.dtype if out_dtype is None else out_dtype

    x_isz = jnp.dtype(x.dtype).itemsize
    c_isz = jnp.dtype(compute_dtype).itemsize
    o_isz = jnp.dtype(out_dtype).itemsize

    # x stays in its original dtype: the residual add is full precision and the
    # cast to compute_dtype (bf16) happens inside the kernel only for the MXU.
    x2d = x.reshape(N, d_in)
    w1c = w1.astype(compute_dtype)
    w2c = w2.astype(compute_dtype)
    b1_2d = b1.reshape(1, d_hid).astype(jnp.float32)
    b2_2d = b2.reshape(1, d_in).astype(jnp.float32)
    gamma_2d = gamma.reshape(1, d_in).astype(jnp.float32)
    beta_2d = beta.reshape(1, d_in).astype(jnp.float32)

    # Row tile: multiple of the native sublane packing of the compute dtype.
    row_mult = {1: 32, 2: 16}.get(c_isz, 8)
    tm_eff = max(row_mult, min(int(tm), _round_up(N, row_mult)))
    tm_eff = _round_up(tm_eff, row_mult)
    # Keep >= 2 row tiles when N allows so ("parallel", ...) feeds both v7x TCs.
    if pl.cdiv(N, tm_eff) < 2 and N > row_mult:
        tm_eff = _round_up(pl.cdiv(N, 2), row_mult)

    # Per-generation VMEM budget with headroom for Mosaic internal scratch.
    usable = int(0.8 * _vmem_capacity_bytes())
    while tm_eff > row_mult and _estimate_vmem(
            tm_eff, d_in, 128, x_isz, c_isz, o_isz, 2) > usable:
        tm_eff = _round_up(tm_eff // 2, row_mult)

    n_pad = pl.cdiv(N, tm_eff) * tm_eff
    if n_pad != N:
        x2d = jnp.pad(x2d, ((0, n_pad - N), (0, 0)))

    single_buffer_ok = _single_buffer_supported()
    tk = _choose_tk(tm_eff, d_in, d_hid, x_isz, c_isz, o_isz, usable,
                    max_hidden_chunk, single_buffer_ok)
    d_hid_pad = _round_up(d_hid, tk)
    if d_hid_pad != d_hid:
        # Zero-padded hidden units: relu(0 + 0) = 0 and zero W2 rows -> no-op.
        w1c = jnp.pad(w1c, ((0, 0), (0, d_hid_pad - d_hid)))
        w2c = jnp.pad(w2c, ((0, d_hid_pad - d_hid), (0, 0)))
        b1_2d = jnp.pad(b1_2d, ((0, 0), (0, d_hid_pad - d_hid)))
    nk = d_hid_pad // tk

    w_bufs = 1 if (nk == 1 and single_buffer_ok) else 2
    est = _estimate_vmem(tm_eff, d_in, tk, x_isz, c_isz, o_isz, w_bufs)
    vmem_limit = int(min(usable, max(32 * 1024 * 1024, int(1.25 * est))))

    cost = pl.CostEstimate(
        flops=4 * n_pad * d_in * d_hid_pad + 12 * n_pad * d_in,
        transcendentals=n_pad,  # one rsqrt per token row
        bytes_accessed=(n_pad * d_in * (x_isz + o_isz)
                        + 2 * d_in * d_hid_pad * c_isz
                        + d_hid_pad * 4 + 3 * d_in * 4),
    )

    single_w = (nk == 1)  # weight blocks grid-invariant -> one buffer suffices
    grid = (n_pad // tm_eff, nk)

    out2d = pl.pallas_call(
        ffn_kernel,
        out_shape=jax.ShapeDtypeStruct((n_pad, d_in), out_dtype),
        grid_spec=pltpu.PrefetchScalarGridSpec(
            num_scalar_prefetch=0,
            grid=grid,
            in_specs=[
                pl.BlockSpec((tm_eff, d_in), lambda i, k: (i, 0)),            # x
                _param_spec((d_in, tk), lambda i, k: (0, k),
                            single_buffer=single_w),                          # W1
                _param_spec((1, tk), lambda i, k: (0, k),
                            single_buffer=single_w),                          # b1
                _param_spec((tk, d_in), lambda i, k: (k, 0),
                            single_buffer=single_w),                          # W2
                _param_spec((1, d_in), lambda i, k: (0, 0), single_buffer=True),  # b2
                _param_spec((1, d_in), lambda i, k: (0, 0), single_buffer=True),  # gamma
                _param_spec((1, d_in), lambda i, k: (0, 0), single_buffer=True),  # beta
            ],
            out_specs=pl.BlockSpec((tm_eff, d_in), lambda i, k: (i, 0)),
            scratch_shapes=[pltpu.VMEM((tm_eff, d_in), jnp.float32)],
        ),
        compiler_params=pltpu.CompilerParams(
            dimension_semantics=("parallel", "arbitrary"),
            vmem_limit_bytes=vmem_limit,
        ),
        cost_estimate=cost,
    )(x2d, w1c, b1_2d, w2c, b2_2d, gamma_2d, beta_2d)

    if n_pad != N:
        out2d = out2d[:N]
    return out2d.reshape(B, S, d_in)


def _reference(x, w1, b1, w2, b2, gamma, beta, *, matmul_dtype=jnp.float32):
    """Pure-JAX reference; matmul_dtype mirrors the kernel's MXU operand dtype."""
    xm = x.astype(matmul_dtype)
    h = jnp.dot(xm, w1.astype(matmul_dtype),
                preferred_element_type=jnp.float32) + b1.astype(jnp.float32)
    h = jnp.maximum(h, 0.0)
    y = jnp.dot(h.astype(matmul_dtype), w2.astype(matmul_dtype),
                preferred_element_type=jnp.float32) + b2.astype(jnp.float32)
    y = y + x.astype(jnp.float32)  # residual in full precision (as in kernel)
    mean = jnp.mean(y, axis=-1, keepdims=True)
    var = jnp.mean(jnp.square(y - mean), axis=-1, keepdims=True)
    y = (y - mean) * jax.lax.rsqrt(var + 1e-6)
    return (y * gamma.astype(jnp.float32) + beta.astype(jnp.float32)).astype(x.dtype)


if __name__ == "__main__":
    # Small but lane-dense shapes (feature dims multiples of 128).
    B, S, d_in, d_hid = 4, 128, 128, 256

    key = jax.random.PRNGKey(0)
    kx, k1, kb1, k2, kb2, kg, kb = jax.random.split(key, 7)

    x = jax.random.normal(kx, (B, S, d_in), dtype=jnp.float32)

    # Linear weights stored pre-transposed: (in, out) so the kernel does x @ W.
    w1 = jax.random.normal(k1, (d_in, d_hid), dtype=jnp.float32) * (1.0 / d_in) ** 0.5
    b1 = jax.random.normal(kb1, (d_hid,), dtype=jnp.float32) * 0.01
    w2 = jax.random.normal(k2, (d_hid, d_in), dtype=jnp.float32) * (1.0 / d_hid) ** 0.5
    b2 = jax.random.normal(kb2, (d_in,), dtype=jnp.float32) * 0.01
    gamma = 1.0 + 0.1 * jax.random.normal(kg, (d_in,), dtype=jnp.float32)
    beta = 0.1 * jax.random.normal(kb, (d_in,), dtype=jnp.float32)

    # 1) Default path (fully-resident weights, 2 row tiles for megacore).
    out = positionwise_feed_forward(x, w1, b1, w2, b2, gamma, beta)
    out = jax.block_until_ready(out)
    assert out.shape == (B, S, d_in)

    ref_mixed = _reference(x, w1, b1, w2, b2, gamma, beta, matmul_dtype=jnp.bfloat16)
    assert jnp.allclose(out, ref_mixed, atol=2e-4, rtol=2e-4), \
        "mismatch vs mixed-precision reference"

    ref_f32 = _reference(x, w1, b1, w2, b2, gamma, beta, matmul_dtype=jnp.float32)
    assert float(jnp.max(jnp.abs(out - ref_f32))) < 0.1, \
        "drifted too far from f32 reference"

    # 2) Force the d_hid-chunked accumulation path (v7x-style weight streaming).
    out_chunk = positionwise_feed_forward(x, w1, b1, w2, b2, gamma, beta,
                                          max_hidden_chunk=128)
    out_chunk = jax.block_until_ready(out_chunk)
    assert jnp.allclose(out_chunk, ref_mixed, atol=2e-4, rtol=2e-4), \
        "mismatch on d_hid-chunked path"

    # 3) Exercise the token-padding path (N not divisible by the row tile).
    x_odd = x[:, :57]  # N = 4 * 57 = 228
    out_odd = positionwise_feed_forward(x_odd, w1, b1, w2, b2, gamma, beta)
    out_odd = jax.block_until_ready(out_odd)
    ref_odd = _reference(x_odd, w1, b1, w2, b2, gamma, beta, matmul_dtype=jnp.bfloat16)
    assert out_odd.shape == x_odd.shape
    assert jnp.allclose(out_odd, ref_odd, atol=2e-4, rtol=2e-4), \
        "mismatch on padded path"

    print("KERNEL_OK")
</pallas_src>

<mosaic_0001>
module attributes {stable_mosaic.version = 11 : i64} {
  func.func @ffn_kernel(%arg0: i32, %arg1: i32, %arg2: memref<256x128xf32, #tpu.memory_space<vmem>>, %arg3: memref<128x256xbf16, #tpu.memory_space<vmem>>, %arg4: memref<1x256xf32, #tpu.memory_space<vmem>>, %arg5: memref<256x128xbf16, #tpu.memory_space<vmem>>, %arg6: memref<1x128xf32, #tpu.memory_space<vmem>>, %arg7: memref<1x128xf32, #tpu.memory_space<vmem>>, %arg8: memref<1x128xf32, #tpu.memory_space<vmem>>, %arg9: memref<256x128xf32, #tpu.memory_space<vmem>>, %arg10: memref<256x128xf32, #tpu.memory_space<vmem>>) attributes {dimension_semantics = [#tpu.dimension_semantics<parallel>, #tpu.dimension_semantics<arbitrary>], iteration_bounds = array<i64: 2, 1>, scalar_prefetch = 0 : i64, scratch_operands = 1 : i64, tpu.core_type = #tpu.core_type<tc>, window_params = [{transform_indices = @transform_0, window_bounds = array<i64: 256, 128>}, {transform_indices = @transform_1, window_bounds = array<i64: 128, 256>}, {transform_indices = @transform_2, window_bounds = array<i64: 1, 256>}, {transform_indices = @transform_3, window_bounds = array<i64: 256, 128>}, {pipeline_mode = #tpu.pipeline_mode<synchronous>, transform_indices = @transform_4, window_bounds = array<i64: 1, 128>}, {pipeline_mode = #tpu.pipeline_mode<synchronous>, transform_indices = @transform_5, window_bounds = array<i64: 1, 128>}, {pipeline_mode = #tpu.pipeline_mode<synchronous>, transform_indices = @transform_6, window_bounds = array<i64: 1, 128>}, {transform_indices = @transform_7, window_bounds = array<i64: 256, 128>}]} {
    %c0 = arith.constant 0 : index
    %c0_0 = arith.constant 0 : index
    %0 = vector.load %arg2[%c0, %c0_0] : memref<256x128xf32, #tpu.memory_space<vmem>>, vector<256x128xf32>
    %1 = arith.truncf %0 : vector<256x128xf32> to vector<256x128xbf16>
    %c0_1 = arith.constant 0 : index
    %c0_2 = arith.constant 0 : index
    %2 = vector.load %arg3[%c0_1, %c0_2] : memref<128x256xbf16, #tpu.memory_space<vmem>>, vector<128x256xbf16>
    %cst = arith.constant dense<0.000000e+00> : vector<256x256xf32>
    %3 = tpu.matmul %1, %2, %cst {dimension_numbers = #tpu.dot_dimension_numbers<[1], [0], [0], [1], [0, 0, 1, 1], [], []>} : vector<256x128xbf16>, vector<128x256xbf16>, vector<256x256xf32> -> vector<256x256xf32>
    %c0_3 = arith.constant 0 : index
    %c0_4 = arith.constant 0 : index
    %4 = vector.load %arg4[%c0_3, %c0_4] : memref<1x256xf32, #tpu.memory_space<vmem>>, vector<1x256xf32>
    %5 = vector.broadcast %4 : vector<1x256xf32> to vector<256x256xf32>
    %6 = arith.addf %3, %5 : vector<256x256xf32>
    %cst_5 = arith.constant 0.000000e+00 : f32
    %7 = vector.broadcast %cst_5 : f32 to vector<256x256xf32>
    %8 = arith.maximumf %6, %7 : vector<256x256xf32>
    %9 = arith.truncf %8 : vector<256x256xf32> to vector<256x256xbf16>
    %c0_6 = arith.constant 0 : index
    %c0_7 = arith.constant 0 : index
    %10 = vector.load %arg5[%c0_6, %c0_7] : memref<256x128xbf16, #tpu.memory_space<vmem>>, vector<256x128xbf16>
    %cst_8 = arith.constant dense<0.000000e+00> : vector<256x128xf32>
    %11 = tpu.matmul %9, %10, %cst_8 {dimension_numbers = #tpu.dot_dimension_numbers<[1], [0], [0], [1], [0, 0, 1, 1], [], []>} : vector<256x256xbf16>, vector<256x128xbf16>, vector<256x128xf32> -> vector<256x128xf32>
    %c0_i32 = arith.constant 0 : i32
    %12 = arith.cmpi eq, %arg1, %c0_i32 : i32
    %13 = arith.extui %12 : i1 to i32
    %c0_i32_9 = arith.constant 0 : i32
    %14 = arith.cmpi ne, %13, %c0_i32_9 : i32
    scf.if %14 {
      %c0_14 = arith.constant 0 : index
      %c0_15 = arith.constant 0 : index
      %21 = vector.load %arg10[%c0_14, %c0_15] : memref<256x128xf32, #tpu.memory_space<vmem>>, vector<256x128xf32>
      tpu.vector_store %arg10[%c0_14, %c0_15], %11 {strides = array<i32>} : memref<256x128xf32, #tpu.memory_space<vmem>>, vector<256x128xf32>,
    } else {
    }
    %c0_i32_10 = arith.constant 0 : i32
    %15 = arith.cmpi sgt, %arg1, %c0_i32_10 : i32
    %16 = arith.extui %15 : i1 to i32
    %c0_i32_11 = arith.constant 0 : i32
    %17 = arith.cmpi ne, %16, %c0_i32_11 : i32
    scf.if %17 {
      %c0_14 = arith.constant 0 : index
      %c0_15 = arith.constant 0 : index
      %21 = vector.load %arg10[%c0_14, %c0_15] : memref<256x128xf32, #tpu.memory_space<vmem>>, vector<256x128xf32>
      %22 = arith.addf %21, %11 : vector<256x128xf32>
      %c0_16 = arith.constant 0 : index
      %c0_17 = arith.constant 0 : index
      %23 = vector.load %arg10[%c0_16, %c0_17] : memref<256x128xf32, #tpu.memory_space<vmem>>, vector<256x128xf32>
      tpu.vector_store %arg10[%c0_16, %c0_17], %22 {strides = array<i32>} : memref<256x128xf32, #tpu.memory_space<vmem>>, vector<256x128xf32>,
    } else {
    }
    %c0_i32_12 = arith.constant 0 : i32
    %18 = arith.cmpi eq, %arg1, %c0_i32_12 : i32
    %19 = arith.extui %18 : i1 to i32
    %c0_i32_13 = arith.constant 0 : i32
    %20 = arith.cmpi ne, %19, %c0_i32_13 : i32
    scf.if %20 {
      %c0_14 = arith.constant 0 : index
      %c0_15 = arith.constant 0 : index
      %21 = vector.load %arg10[%c0_14, %c0_15] : memref<256x128xf32, #tpu.memory_space<vmem>>, vector<256x128xf32>
      %c0_16 = arith.constant 0 : index
      %c0_17 = arith.constant 0 : index
      %22 = vector.load %arg6[%c0_16, %c0_17] : memref<1x128xf32, #tpu.memory_space<vmem>>, vector<1x128xf32>
      %23 = vector.broadcast %22 : vector<1x128xf32> to vector<256x128xf32>
      %24 = arith.addf %21, %23 : vector<256x128xf32>
      %c0_18 = arith.constant 0 : index
      %c0_19 = arith.constant 0 : index
      %25 = vector.load %arg2[%c0_18, %c0_19] : memref<256x128xf32, #tpu.memory_space<vmem>>, vector<256x128xf32>
      %26 = arith.addf %24, %25 : vector<256x128xf32>
      %cst_20 = arith.constant dense<0.000000e+00> : vector<256xf32>
      %27 = vector.multi_reduction <add>, %26, %cst_20 [1] : vector<256x128xf32> to vector<256xf32>
      %28 = vector.shape_cast %27 : vector<256xf32> to vector<256x1xf32>
      %29 = arith.mulf %26, %26 : vector<256x128xf32>
      %cst_21 = arith.constant dense<0.000000e+00> : vector<256xf32>
      %30 = vector.multi_reduction <add>, %29, %cst_21 [1] : vector<256x128xf32> to vector<256xf32>
      %31 = vector.shape_cast %30 : vector<256xf32> to vector<256x1xf32>
      %cst_22 = arith.constant 7.812500e-03 : f32
      %32 = vector.broadcast %cst_22 : f32 to vector<256x1xf32>
      %33 = arith.mulf %28, %32 : vector<256x1xf32>
      %cst_23 = arith.constant 7.812500e-03 : f32
      %34 = vector.broadcast %cst_23 : f32 to vector<256x1xf32>
      %35 = arith.mulf %31, %34 : vector<256x1xf32>
      %36 = arith.mulf %33, %33 : vector<256x1xf32>
      %37 = arith.subf %35, %36 : vector<256x1xf32>
      %38 = vector.broadcast %33 : vector<256x1xf32> to vector<256x128xf32>
      %39 = arith.subf %26, %38 : vector<256x128xf32>
      %cst_24 = arith.constant 9.99999997E-7 : f32
      %40 = vector.broadcast %cst_24 : f32 to vector<256x1xf32>
      %41 = arith.addf %37, %40 : vector<256x1xf32>
      %42 = math.rsqrt %41 : vector<256x1xf32>
      %43 = vector.broadcast %42 : vector<256x1xf32> to vector<256x128xf32>
      %44 = arith.mulf %39, %43 : vector<256x128xf32>
      %c0_25 = arith.constant 0 : index
      %c0_26 = arith.constant 0 : index
      %45 = vector.load %arg7[%c0_25, %c0_26] : memref<1x128xf32, #tpu.memory_space<vmem>>, vector<1x128xf32>
      %46 = vector.broadcast %45 : vector<1x128xf32> to vector<256x128xf32>
      %47 = arith.mulf %44, %46 : vector<256x128xf32>
      %c0_27 = arith.constant 0 : index
      %c0_28 = arith.constant 0 : index
      %48 = vector.load %arg8[%c0_27, %c0_28] : memref<1x128xf32, #tpu.memory_space<vmem>>, vector<1x128xf32>
      %49 = vector.broadcast %48 : vector<1x128xf32> to vector<256x128xf32>
      %50 = arith.addf %47, %49 : vector<256x128xf32>
      %c0_29 = arith.constant 0 : index
      %c0_30 = arith.constant 0 : index
      %51 = vector.load %arg9[%c0_29, %c0_30] : memref<256x128xf32, #tpu.memory_space<vmem>>, vector<256x128xf32>
      tpu.vector_store %arg9[%c0_29, %c0_30], %50 {strides = array<i32>} : memref<256x128xf32, #tpu.memory_space<vmem>>, vector<256x128xf32>,
    } else {
    }
    return
  }
  func.func @transform_0(%arg0: i32, %arg1: i32) -> (i32, i32) {
    %c0_i32 = arith.constant 0 : i32
    %c0_i32_0 = arith.constant 0 : i32
    return %arg0, %c0_i32 : i32, i32
  }
  func.func @transform_1(%arg0: i32, %arg1: i32) -> (i32, i32) {
    %c0_i32 = arith.constant 0 : i32
    %c0_i32_0 = arith.constant 0 : i32
    return %c0_i32, %arg1 : i32, i32
  }
  func.func @transform_2(%arg0: i32, %arg1: i32) -> (i32, i32) {
    %c0_i32 = arith.constant 0 : i32
    %c0_i32_0 = arith.constant 0 : i32
    return %c0_i32, %arg1 : i32, i32
  }
  func.func @transform_3(%arg0: i32, %arg1: i32) -> (i32, i32) {
    %c0_i32 = arith.constant 0 : i32
    %c0_i32_0 = arith.constant 0 : i32
    return %arg1, %c0_i32 : i32, i32
  }
  func.func @transform_4(%arg0: i32, %arg1: i32) -> (i32, i32) {
    %c0_i32 = arith.constant 0 : i32
    %c0_i32_0 = arith.constant 0 : i32
    %c0_i32_1 = arith.constant 0 : i32
    return %c0_i32, %c0_i32_0 : i32, i32
  }
  func.func @transform_5(%arg0: i32, %arg1: i32) -> (i32, i32) {
    %c0_i32 = arith.constant 0 : i32
    %c0_i32_0 = arith.constant 0 : i32
    %c0_i32_1 = arith.constant 0 : i32
    return %c0_i32, %c0_i32_0 : i32, i32
  }
  func.func @transform_6(%arg0: i32, %arg1: i32) -> (i32, i32) {
    %c0_i32 = arith.constant 0 : i32
    %c0_i32_0 = arith.constant 0 : i32
    %c0_i32_1 = arith.constant 0 : i32
    return %c0_i32, %c0_i32_0 : i32, i32
  }
  func.func @transform_7(%arg0: i32, %arg1: i32) -> (i32, i32) {
    %c0_i32 = arith.constant 0 : i32
    %c0_i32_0 = arith.constant 0 : i32
    return %arg0, %c0_i32 : i32, i32
  }
}

</mosaic_0001>

<llo_original>
// kernel: tpu_custom_call.1
$region0: #{tpu_custom_call.1}
  #allocation0 [shape = 'u32[]', space=smem, size = 0x4, offset = 0x4, fixed_abs, tag = 'smem constant byte address 0x4 - core index']
  #allocation1 [shape = 'u32[144,128]{1,0:T(1,128)}', space=vmem, size = 0x12000, scoped, tag = 'internal scratch']
  #allocation2 [shape = 'f32[256,128]{1,0:T(8,128)}', space=vmem, size = 0x20000, scoped, tag = 'scratch operand']
  %s0 = inlined_call_operand.hbm [shape: f32[512,128], index: 0, kind: input, shape index: {}]
  %s1 = inlined_call_operand.hbm [shape: bf16[128,256], index: 1, kind: input, shape index: {}]
  %s2 = inlined_call_operand.vmem [shape: f32[1,256], index: 2, kind: input, shape index: {}]
  %s3 = inlined_call_operand.hbm [shape: bf16[256,128], index: 3, kind: input, shape index: {}]
  %s4 = inlined_call_operand.vmem [shape: f32[1,128], index: 4, kind: input, shape index: {}]
  %s5 = inlined_call_operand.vmem [shape: f32[1,128], index: 5, kind: input, shape index: {}]
  %s6 = inlined_call_operand.vmem [shape: f32[1,128], index: 6, kind: input, shape index: {}]
  %s7 = inlined_call_operand.hbm [shape: f32[512,128], index: 7, kind: output, shape index: {}]
  %s8 = sld [smem:[#allocation0]]
  $region85: #{tpu_custom_call.1} parent=0
    _
  %s10 = ssub.s32 1, %s8
  %s11 = scalar_select 0, %s10, %s8
  $region1: #{tpu_custom_call.1} parent=0
    #allocation3 [shape = 'u8[262144]{0}', space=vmem, size = 0x40000, scoped, tag = 'input window, operand 0']
    #allocation4 [shape = 's32[2]{0}', space=sflag, size = 0x8, scoped, tag = 'scoped memory for tpu_custom_call.1']
    #allocation5 [shape = 's32[2]{0}', space=sflag, size = 0x8, scoped, tag = 'scoped memory for tpu_custom_call.1']
    #allocation6 [shape = 'u8[65536]{0}', space=vmem, size = 0x10000, scoped, tag = 'input window, operand 1, single buffered']
    #allocation7 [shape = 's32[1]{0}', space=sflag, size = 0x4, scoped, tag = 'scoped memory for tpu_custom_call.1']
    #allocation8 [shape = 'u8[65536]{0}', space=vmem, size = 0x10000, scoped, tag = 'input window, operand 3, single buffered']
    #allocation9 [shape = 'u8[262144]{0}', space=vmem, size = 0x40000, scoped, tag = 'output window, operand 0']
    %12 = vsyncpa [#allocation4], 0
    %s13 = scalar_lea.sflag [#allocation4], 1
    %14 = vsyncpa %s13, 0
    %15 = vsyncpa [#allocation7], 0
    %16 = vsyncpa [#allocation5], 0
    %s17 = scalar_lea.sflag [#allocation5], 1
    %18 = vsyncpa %s17, 0
    loop: start=0, step=1, limit=4
    $region2: #{tpu_custom_call.1} parent=1 // loop_pre_header
      _
    $region3: #{tpu_custom_call.1} parent=1 // loop_header
      %s20 = sphi 0, %s24
      %p21 = scmp.ge.s32.totalorder %s20, 4
      %s27 = sphi 0, %s39
      %s28 = sphi 0, %s35
      %s29 = sphi 0, %s27
      %s30 = sphi 0, %s28
      %s31 = sphi 0, %s29
      %s32 = sphi 0, %s30
      %s42 = sphi 0, %s44
      %s45 = sphi 0, %s42
      %s46 = sphi 0, %s45
      %s62 = sphi 0, %s46
      %s68 = sphi 0, %s70
      %s71 = sphi 0, %s68
      %s72 = sphi 0, %s71
      %s88 = sphi 0, %s72
      %s94 = sphi 0, %s96
      %s97 = sphi 0, %s94
      %s98 = sphi 0, %s97
      %s114 = sphi 0, %s98
      %s120 = sphi 0, %s122
      %s123 = sphi 0, %s120
      %s124 = sphi 0, %s123
      %s140 = sphi 0, %s124
      %s144 = sphi 0, %s144
      %s146 = sphi 0, %s144
      %s147 = sphi 0, %s146
      %s161 = sphi 0, %s147
      %s165 = sphi 0, %s165
      %s167 = sphi 0, %s165
      %s168 = sphi 0, %s167
      %s182 = sphi 0, %s168
      %s186 = sphi 0, %s186
      %s188 = sphi 0, %s186
      %s189 = sphi 0, %s188
      %s203 = sphi 0, %s189
      %s209 = sphi 0, %s211
      %s212 = sphi 0, %s209
      %s213 = sphi 0, %s212
      %s229 = sphi 0, %s213
    $region4: #{tpu_custom_call.1} parent=1 // loop_header_branch
      %23 = sbr.rel (%p21) target = $region8
    $region5: #{tpu_custom_call.1} parent=1 // loop_body
      %s25 = ssub.s32 %s20, 1
      %s26 = ssub.s32 %s20, 2
      %s33 = sadd.s32 1, %s28
      %p34 = scmp.ge.s32.totalorder %s33, 1
      %s35 = scalar_select %p34, 0, %s33
      %s36 = sadd.s32 1, %s27
      %s37 = scalar_select %p34, %s36, %s27
      %p38 = scmp.ge.s32.totalorder %s37, 2
      %s39 = scalar_select %p38, 0, %s37
      %s40 = ssub.s32 %s27, %s39
      %p41 = scmp.eq.s32.totalorder %s40, 0
      %s43 = sadd.s32 %s42, 1
      %s44 = scalar_select %p41, %s42, %s43
      %p47 = pneg %p41
      %p48 = scmp.eq.s32.totalorder %s20, 1
      %p49 = por %p47, %p48
      %p50 = scmp.ne.s32.totalorder %s42, %s45
      %p51 = scmp.eq.s32.totalorder %s20, 0
      %p52 = por %p50, %p51
      %p53 = scmp.ne.s32.totalorder %s42, %s45
      %p54 = scmp.eq.s32.totalorder %s25, 1
      %p55 = por %p53, %p54
      %p56 = scmp.ne.s32.totalorder %s45, %s46
      %p57 = scmp.eq.s32.totalorder %s25, 0
      %p58 = por %p56, %p57
      %p59 = scmp.ne.s32.totalorder %s45, %s46
      %p60 = scmp.eq.s32.totalorder %s26, 1
      %p61 = por %p59, %p60
      %p63 = scmp.ne.s32.totalorder %s46, %s62
      %p64 = scmp.eq.s32.totalorder %s26, 0
      %p65 = por %p63, %p64
      %s66 = ssub.s32 %s28, %s35
      %p67 = scmp.eq.s32.totalorder %s66, 0
      %s69 = sadd.s32 %s68, 1
      %s70 = scalar_select %p67, %s68, %s69
      %p73 = pneg %p67
      %p74 = scmp.eq.s32.totalorder %s20, 1
      %p75 = por %p73, %p74
      %p76 = scmp.ne.s32.totalorder %s68, %s71
      %p77 = scmp.eq.s32.totalorder %s20, 0
      %p78 = por %p76, %p77
      %p79 = scmp.ne.s32.totalorder %s68, %s71
      %p80 = scmp.eq.s32.totalorder %s25, 1
      %p81 = por %p79, %p80
      %p82 = scmp.ne.s32.totalorder %s71, %s72
      %p83 = scmp.eq.s32.totalorder %s25, 0
      %p84 = por %p82, %p83
      %p85 = scmp.ne.s32.totalorder %s71, %s72
      %p86 = scmp.eq.s32.totalorder %s26, 1
      %p87 = por %p85, %p86
      %p89 = scmp.ne.s32.totalorder %s72, %s88
      %p90 = scmp.eq.s32.totalorder %s26, 0
      %p91 = por %p89, %p90
      %s92 = ssub.s32 %s28, %s35
      %p93 = scmp.eq.s32.totalorder %s92, 0
      %s95 = sadd.s32 %s94, 1
      %s96 = scalar_select %p93, %s94, %s95
      %p99 = pneg %p93
      %p100 = scmp.eq.s32.totalorder %s20, 1
      %p101 = por %p99, %p100
      %p102 = scmp.ne.s32.totalorder %s94, %s97
      %p103 = scmp.eq.s32.totalorder %s20, 0
      %p104 = por %p102, %p103
      %p105 = scmp.ne.s32.totalorder %s94, %s97
      %p106 = scmp.eq.s32.totalorder %s25, 1
      %p107 = por %p105, %p106
      %p108 = scmp.ne.s32.totalorder %s97, %s98
      %p109 = scmp.eq.s32.totalorder %s25, 0
      %p110 = por %p108, %p109
      %p111 = scmp.ne.s32.totalorder %s97, %s98
      %p112 = scmp.eq.s32.totalorder %s26, 1
      %p113 = por %p111, %p112
      %p115 = scmp.ne.s32.totalorder %s98, %s114
      %p116 = scmp.eq.s32.totalorder %s26, 0
      %p117 = por %p115, %p116
      %s118 = ssub.s32 %s28, %s35
      %p119 = scmp.eq.s32.totalorder %s118, 0
      %s121 = sadd.s32 %s120, 1
      %s122 = scalar_select %p119, %s120, %s121
      %p125 = pneg %p119
      %p126 = scmp.eq.s32.totalorder %s20, 1
      %p127 = por %p125, %p126
      %p128 = scmp.ne.s32.totalorder %s120, %s123
      %p129 = scmp.eq.s32.totalorder %s20, 0
      %p130 = por %p128, %p129
      %p131 = scmp.ne.s32.totalorder %s120, %s123
      %p132 = scmp.eq.s32.totalorder %s25, 1
      %p133 = por %p131, %p132
      %p134 = scmp.ne.s32.totalorder %s123, %s124
      %p135 = scmp.eq.s32.totalorder %s25, 0
      %p136 = por %p134, %p135
      %p137 = scmp.ne.s32.totalorder %s123, %s124
      %p138 = scmp.eq.s32.totalorder %s26, 1
      %p139 = por %p137, %p138
      %p141 = scmp.ne.s32.totalorder %s124, %s140
      %p142 = scmp.eq.s32.totalorder %s26, 0
      %p143 = por %p141, %p142
      %s145 = sadd.s32 %s144, 1
      %p148 = scmp.eq.s32.totalorder %s20, 1
      %p149 = scmp.ne.s32.totalorder %s144, %s146
      %p150 = scmp.eq.s32.totalorder %s20, 0
      %p151 = por %p149, %p150
      %p152 = scmp.ne.s32.totalorder %s144, %s146
      %p153 = scmp.eq.s32.totalorder %s25, 1
      %p154 = por %p152, %p153
      %p155 = scmp.ne.s32.totalorder %s146, %s147
      %p156 = scmp.eq.s32.totalorder %s25, 0
      %p157 = por %p155, %p156
      %p158 = scmp.ne.s32.totalorder %s146, %s147
      %p159 = scmp.eq.s32.totalorder %s26, 1
      %p160 = por %p158, %p159
      %p162 = scmp.ne.s32.totalorder %s147, %s161
      %p163 = scmp.eq.s32.totalorder %s26, 0
      %p164 = por %p162, %p163
      %s166 = sadd.s32 %s165, 1
      %p169 = scmp.eq.s32.totalorder %s20, 1
      %p170 = scmp.ne.s32.totalorder %s165, %s167
      %p171 = scmp.eq.s32.totalorder %s20, 0
      %p172 = por %p170, %p171
      %p173 = scmp.ne.s32.totalorder %s165, %s167
      %p174 = scmp.eq.s32.totalorder %s25, 1
      %p175 = por %p173, %p174
      %p176 = scmp.ne.s32.totalorder %s167, %s168
      %p177 = scmp.eq.s32.totalorder %s25, 0
      %p178 = por %p176, %p177
      %p179 = scmp.ne.s32.totalorder %s167, %s168
      %p180 = scmp.eq.s32.totalorder %s26, 1
      %p181 = por %p179, %p180
      %p183 = scmp.ne.s32.totalorder %s168, %s182
      %p184 = scmp.eq.s32.totalorder %s26, 0
      %p185 = por %p183, %p184
      %s187 = sadd.s32 %s186, 1
      %p190 = scmp.eq.s32.totalorder %s20, 1
      %p191 = scmp.ne.s32.totalorder %s186, %s188
      %p192 = scmp.eq.s32.totalorder %s20, 0
      %p193 = por %p191, %p192
      %p194 = scmp.ne.s32.totalorder %s186, %s188
      %p195 = scmp.eq.s32.totalorder %s25, 1
      %p196 = por %p194, %p195
      %p197 = scmp.ne.s32.totalorder %s188, %s189
      %p198 = scmp.eq.s32.totalorder %s25, 0
      %p199 = por %p197, %p198
      %p200 = scmp.ne.s32.totalorder %s188, %s189
      %p201 = scmp.eq.s32.totalorder %s26, 1
      %p202 = por %p200, %p201
      %p204 = scmp.ne.s32.totalorder %s189, %s203
      %p205 = scmp.eq.s32.totalorder %s26, 0
      %p206 = por %p204, %p205
      %s207 = ssub.s32 %s27, %s39
      %p208 = scmp.eq.s32.totalorder %s207, 0
      %s210 = sadd.s32 %s209, 1
      %s211 = scalar_select %p208, %s209, %s210
      %p214 = pneg %p208
      %p215 = scmp.eq.s32.totalorder %s20, 1
      %p216 = por %p214, %p215
      %p217 = scmp.ne.s32.totalorder %s209, %s212
      %p218 = scmp.eq.s32.totalorder %s20, 0
      %p219 = por %p217, %p218
      %p220 = scmp.ne.s32.totalorder %s209, %s212
      %p221 = scmp.eq.s32.totalorder %s25, 1
      %p222 = por %p220, %p221
      %p223 = scmp.ne.s32.totalorder %s212, %s213
      %p224 = scmp.eq.s32.totalorder %s25, 0
      %p225 = por %p223, %p224
      %p226 = scmp.ne.s32.totalorder %s212, %s213
      %p227 = scmp.eq.s32.totalorder %s26, 1
      %p228 = por %p226, %p227
      %p230 = scmp.ne.s32.totalorder %s213, %s229
      %p231 = scmp.eq.s32.totalorder %s26, 0
      %p232 = por %p230, %p231
      %p233 = scmp.le.s32.totalorder 1, %s20
      %p234 = scmp.lt.s32.totalorder %s20, 3
      %p235 = pnand %p233, %p234
      %p236 = pneg %p235
      // Predicated region
      $region9: #{tpu_custom_call.1} parent=5 // pred_check
        _
      $region10: #{tpu_custom_call.1} parent=5 // pred_check_branch
        %238 = sbr.rel (%p235) target = $region12
      $region11: #{tpu_custom_call.1} parent=5 // pred_region
        %s239 = ssub.s32 %s20, 1
        // Predicated region
        $region13: #{tpu_custom_call.1} parent=11 // pred_check
          %p240 = pneg %p84
        $region14: #{tpu_custom_call.1} parent=11 // pred_check_branch
          %242 = sbr.rel (%p240) target = $region16
        $region15: #{tpu_custom_call.1} parent=11 // pred_region
          %s243 = smul.u32 2, %s30
          %s245 = ssub.s32 2048, 2048
          %246 = vsyncadd [#allocation7], %s245
          %s247 = smul.addr %s243, 64
          %s248 = scalar_lea.hbm %s1, %s247
          %s249 = sshll.u32 [#allocation6], 4
          %s250 = int_to_ptr.vmem [resolvable:$true] %s249
          %255 = dma.hbm_to_vmem [thread:$0]  %s248, 2048, %s250, [#allocation7], 128, 128, 8
        $region16: #{tpu_custom_call.1} parent=11 // pred_fallthru
          _
        // Predicated region
        $region17: #{tpu_custom_call.1} parent=11 // pred_check
          %p256 = pneg %p110
        $region18: #{tpu_custom_call.1} parent=11 // pred_check_branch
          %258 = sbr.rel (%p256) target = $region20
        $region19: #{tpu_custom_call.1} parent=11 // pred_region
          %s259 = smul.u32 2, %s30
          %p260 = scmp.lt.s32.totalorder %s259, 1
          %s261 = scalar_select %p260, %s259, 1
          %s262 = scalar_lea.vmem %s2, %s261
          %s263 = smul.u32 2, %s30
        $region20: #{tpu_custom_call.1} parent=11 // pred_fallthru
          _
        // Predicated region
        $region21: #{tpu_custom_call.1} parent=11 // pred_check
          %p264 = pneg %p136
        $region22: #{tpu_custom_call.1} parent=11 // pred_check_branch
          %266 = sbr.rel (%p264) target = $region24
        $region23: #{tpu_custom_call.1} parent=11 // pred_region
          %s267 = smul.u32 32, %s30
          %s269 = ssub.s32 2048, 2048
          %270 = vsyncadd [#allocation7], %s269
          %s271 = smul.addr %s267, 64
          %s272 = scalar_lea.hbm %s3, %s271
          %s273 = sshll.u32 [#allocation8], 4
          %s274 = int_to_ptr.vmem [resolvable:$true] %s273
          %279 = dma.hbm_to_vmem [thread:$0]  %s272, 2048, %s274, [#allocation7], 64, 64, 4
        $region24: #{tpu_custom_call.1} parent=11 // pred_fallthru
          _
        // Predicated region
        $region25: #{tpu_custom_call.1} parent=11 // pred_check
          %p280 = pneg %p157
        $region26: #{tpu_custom_call.1} parent=11 // pred_check_branch
          %282 = sbr.rel (%p280) target = $region28
        $region27: #{tpu_custom_call.1} parent=11 // pred_region
          _
        $region28: #{tpu_custom_call.1} parent=11 // pred_fallthru
          _
        // Predicated region
        $region29: #{tpu_custom_call.1} parent=11 // pred_check
          %p283 = pneg %p178
        $region30: #{tpu_custom_call.1} parent=11 // pred_check_branch
          %285 = sbr.rel (%p283) target = $region32
        $region31: #{tpu_custom_call.1} parent=11 // pred_region
          _
        $region32: #{tpu_custom_call.1} parent=11 // pred_fallthru
          _
        // Predicated region
        $region33: #{tpu_custom_call.1} parent=11 // pred_check
          %p286 = pneg %p199
        $region34: #{tpu_custom_call.1} parent=11 // pred_check_branch
          %288 = sbr.rel (%p286) target = $region36
        $region35: #{tpu_custom_call.1} parent=11 // pred_region
          _
        $region36: #{tpu_custom_call.1} parent=11 // pred_fallthru
          _
      $region12: #{tpu_custom_call.1} parent=5 // pred_fallthru
        _
      %p289 = scmp.lt.s32.totalorder %s20, 2
      // Predicated region
      $region37: #{tpu_custom_call.1} parent=5 // pred_check
        %p290 = pneg %p289
      $region38: #{tpu_custom_call.1} parent=5 // pred_check_branch
        %292 = sbr.rel (%p290) target = $region40
      $region39: #{tpu_custom_call.1} parent=5 // pred_region
        // Predicated region
        $region41: #{tpu_custom_call.1} parent=39 // pred_check
          %p293 = pneg %p52
        $region42: #{tpu_custom_call.1} parent=39 // pred_check_branch
          %295 = sbr.rel (%p293) target = $region44
        $region43: #{tpu_custom_call.1} parent=39 // pred_region
          %s296 = sand.u32 %s42, 1
          %s297 = scalar_lea.sflag [#allocation4], %s296
          %s298 = sand.u32 %s42, 1
          %s299 = smul.addr %s298, 256
          %s300 = scalar_lea.vmem [#allocation3], %s299
          %s301 = smul.u32 32, %s27
          %s303 = ssub.s32 4096, 4096
          %304 = vsyncadd %s297, %s303
          %s305 = smul.addr %s301, 128
          %s306 = scalar_lea.hbm %s0, %s305
          %s307 = sshll.u32 %s300, 4
          %s308 = int_to_ptr.vmem [resolvable:$true] %s307
          %313 = dma.hbm_to_vmem [thread:$0]  %s306, 4096, %s308, %s297, 128, 128, 8
        $region44: #{tpu_custom_call.1} parent=39 // pred_fallthru
          _
      $region40: #{tpu_custom_call.1} parent=5 // pred_fallthru
        _
      %p314 = scmp.le.s32.totalorder 1, %s20
      %p315 = scmp.lt.s32.totalorder %s20, 3
      %p316 = pnand %p314, %p315
      %p317 = pneg %p316
      // Predicated region
      $region45: #{tpu_custom_call.1} parent=5 // pred_check
        _
      $region46: #{tpu_custom_call.1} parent=5 // pred_check_branch
        %319 = sbr.rel (%p316) target = $region48
      $region47: #{tpu_custom_call.1} parent=5 // pred_region
        %s320 = ssub.s32 %s20, 1
        %s321 = sand.u32 %s45, 1
        %s322 = scalar_lea.sflag [#allocation4], %s321
        %s323 = sand.u32 %s45, 1
        %s324 = smul.addr %s323, 256
        %s325 = scalar_lea.vmem [#allocation3], %s324
        // Predicated region
        $region49: #{tpu_custom_call.1} parent=47 // pred_check
          %p326 = pneg %p58
        $region50: #{tpu_custom_call.1} parent=47 // pred_check_branch
          %328 = sbr.rel (%p326) target = $region52
        $region51: #{tpu_custom_call.1} parent=47 // pred_region
          %329 = dma.done %s322, 4096
        $region52: #{tpu_custom_call.1} parent=47 // pred_fallthru
          _
        // Predicated region
        $region53: #{tpu_custom_call.1} parent=47 // pred_check
          %p330 = pneg %p84
        $region54: #{tpu_custom_call.1} parent=47 // pred_check_branch
          %332 = sbr.rel (%p330) target = $region56
        $region55: #{tpu_custom_call.1} parent=47 // pred_region
          %333 = dma.done [#allocation7], 2048
        $region56: #{tpu_custom_call.1} parent=47 // pred_fallthru
          _
        // Predicated region
        $region57: #{tpu_custom_call.1} parent=47 // pred_check
          %p334 = pneg %p136
        $region58: #{tpu_custom_call.1} parent=47 // pred_check_branch
          %336 = sbr.rel (%p334) target = $region60
        $region59: #{tpu_custom_call.1} parent=47 // pred_region
          %337 = dma.done [#allocation7], 2048
        $region60: #{tpu_custom_call.1} parent=47 // pred_fallthru
          _
        %s338 = sand.u32 %s45, 1
        %s339 = scalar_lea.sflag [#allocation4], %s338
        %s340 = sand.u32 %s45, 1
        %s341 = smul.addr %s340, 256
        %s342 = scalar_lea.vmem [#allocation3], %s341
        %p343 = pneg %p58
        %p344 = pneg %p55
        %p345 = pneg %p84
        %p346 = pneg %p81
        %s347 = smul.u32 2, %s30
        %p348 = scmp.lt.s32.totalorder %s347, 1
        %s349 = scalar_select %p348, %s347, 1
        %s350 = scalar_lea.vmem %s2, %s349
        %p351 = pneg %p110
        %p352 = pneg %p107
        %p353 = pneg %p136
        %p354 = pneg %p133
        %p355 = pneg %p157
        %p356 = pneg %p154
        %p357 = pneg %p178
        %p358 = pneg %p175
        %p359 = pneg %p199
        %p360 = pneg %p196
        %p361 = pneg %p225
        %p362 = pneg %p222
        %s363 = sand.u32 %s212, 1
        %s364 = scalar_lea.sflag [#allocation5], %s363
        %s365 = sand.u32 %s212, 1
        %s366 = smul.addr %s365, 256
        %s367 = scalar_lea.vmem [#allocation9], %s366
        %s368 = smul.u32 32, %s29
        %s369 = smul.u32 2, %s30
        %s370 = smul.u32 2, %s30
        %p371 = scmp.lt.s32.totalorder %s370, 1
        %s372 = scalar_select %p371, %s370, 1
        %s373 = scalar_lea.vmem %s2, %s372
        %s374 = smul.u32 2, %s30
        %s375 = smul.u32 32, %s30
        %s376 = smul.u32 32, %s29
        %v378 = vld [vmem:[%s325] sm:$0xff]
        %v379 = vld [vmem:[%s325 + $0x8] sm:$0xff]
        %v380 = vld [vmem:[%s325 + $0x10] sm:$0xff]
        %v381 = vld [vmem:[%s325 + $0x18] sm:$0xff]
        %v382 = vld [vmem:[%s325 + $0x20] sm:$0xff]
        %v383 = vld [vmem:[%s325 + $0x28] sm:$0xff]
        %v384 = vld [vmem:[%s325 + $0x30] sm:$0xff]
        %v385 = vld [vmem:[%s325 + $0x38] sm:$0xff]
        %v386 = vld [vmem:[%s325 + $0x40] sm:$0xff]
        %v387 = vld [vmem:[%s325 + $0x48] sm:$0xff]
        %v388 = vld [vmem:[%s325 + $0x50] sm:$0xff]
        %v389 = vld [vmem:[%s325 + $0x58] sm:$0xff]
        %v390 = vld [vmem:[%s325 + $0x60] sm:$0xff]
        %v391 = vld [vmem:[%s325 + $0x68] sm:$0xff]
        %v392 = vld [vmem:[%s325 + $0x70] sm:$0xff]
        %v393 = vld [vmem:[%s325 + $0x78] sm:$0xff]
        %v394 = vld [vmem:[%s325 + $0x80] sm:$0xff]
        %v395 = vld [vmem:[%s325 + $0x88] sm:$0xff]
        %v396 = vld [vmem:[%s325 + $0x90] sm:$0xff]
        %v397 = vld [vmem:[%s325 + $0x98] sm:$0xff]
        %v398 = vld [vmem:[%s325 + $0xa0] sm:$0xff]
        %v399 = vld [vmem:[%s325 + $0xa8] sm:$0xff]
        %v400 = vld [vmem:[%s325 + $0xb0] sm:$0xff]
        %v401 = vld [vmem:[%s325 + $0xb8] sm:$0xff]
        %v402 = vld [vmem:[%s325 + $0xc0] sm:$0xff]
        %v403 = vld [vmem:[%s325 + $0xc8] sm:$0xff]
        %v404 = vld [vmem:[%s325 + $0xd0] sm:$0xff]
        %v405 = vld [vmem:[%s325 + $0xd8] sm:$0xff]
        %v406 = vld [vmem:[%s325 + $0xe0] sm:$0xff]
        %v407 = vld [vmem:[%s325 + $0xe8] sm:$0xff]
        %v408 = vld [vmem:[%s325 + $0xf0] sm:$0xff]
        %v409 = vld [vmem:[%s325 + $0xf8] sm:$0xff]
        %v410 = vpack.c.bf16 %v379, %v378
        %v411 = vpack.c.bf16 %v381, %v380
        %v412 = vpack.c.bf16 %v383, %v382
        %v413 = vpack.c.bf16 %v385, %v384
        %v414 = vpack.c.bf16 %v387, %v386
        %v415 = vpack.c.bf16 %v389, %v388
        %v416 = vpack.c.bf16 %v391, %v390
        %v417 = vpack.c.bf16 %v393, %v392
        %v418 = vpack.c.bf16 %v395, %v394
        %v419 = vpack.c.bf16 %v397, %v396
        %v420 = vpack.c.bf16 %v399, %v398
        %v421 = vpack.c.bf16 %v401, %v400
        %v422 = vpack.c.bf16 %v403, %v402
        %v423 = vpack.c.bf16 %v405, %v404
        %v424 = vpack.c.bf16 %v407, %v406
        %v425 = vpack.c.bf16 %v409, %v408
        %v426 = vld [vmem:[#allocation6] sm:$0xff]
        %v427 = vld [vmem:[#allocation6 + $0x8] sm:$0xff]
        %v428 = vld [vmem:[#allocation6 + $0x10] sm:$0xff]
        %v429 = vld [vmem:[#allocation6 + $0x18] sm:$0xff]
        %v430 = vld [vmem:[#allocation6 + $0x20] sm:$0xff]
        %v431 = vld [vmem:[#allocation6 + $0x28] sm:$0xff]
        %v432 = vld [vmem:[#allocation6 + $0x30] sm:$0xff]
        %v433 = vld [vmem:[#allocation6 + $0x38] sm:$0xff]
        %v434 = vld [vmem:[#allocation6 + $0x40] sm:$0xff]
        %v435 = vld [vmem:[#allocation6 + $0x48] sm:$0xff]
        %v436 = vld [vmem:[#allocation6 + $0x50] sm:$0xff]
        %v437 = vld [vmem:[#allocation6 + $0x58] sm:$0xff]
        %v438 = vld [vmem:[#allocation6 + $0x60] sm:$0xff]
        %v439 = vld [vmem:[#allocation6 + $0x68] sm:$0xff]
        %v440 = vld [vmem:[#allocation6 + $0x70] sm:$0xff]
        %v441 = vld [vmem:[#allocation6 + $0x78] sm:$0xff]
        %v442 = vld [vmem:[%s373] sm:$0x3]
        %v444 = vlaneseq
        %v445 = vshrl.u32 %v444, 7
        %v446 = vsub.s32 0, %v445
        %v447 = vrot.slane %v442, %v446
        %v448 = vlaneseq
        %v449 = vshrl.u32 %v448, 7
        %v450 = vsub.s32 1, %v449
        %v451 = vrot.slane %v442, %v450
        %v470 = vunpack.c.l.b16 %v426
        %v471 = vunpack.c.h.b16 %v426
        %v472 = vunpack.c.l.b16 %v427
        %v473 = vunpack.c.h.b16 %v427
        %v474 = vunpack.c.l.b16 %v428
        %v475 = vunpack.c.h.b16 %v428
        %v476 = vunpack.c.l.b16 %v429
        %v477 = vunpack.c.h.b16 %v429
        %v478 = vunpack.c.l.b16 %v430
        %v479 = vunpack.c.h.b16 %v430
        %v480 = vunpack.c.l.b16 %v431
        %v481 = vunpack.c.h.b16 %v431
        %v482 = vunpack.c.l.b16 %v432
        %v483 = vunpack.c.h.b16 %v432
        %v484 = vunpack.c.l.b16 %v433
        %v485 = vunpack.c.h.b16 %v433
        %v486 = vunpack.c.l.b16 %v434
        %v487 = vunpack.c.h.b16 %v434
        %v488 = vunpack.c.l.b16 %v435
        %v489 = vunpack.c.h.b16 %v435
        %v490 = vunpack.c.l.b16 %v436
        %v491 = vunpack.c.h.b16 %v436
        %v492 = vunpack.c.l.b16 %v437
        %v493 = vunpack.c.h.b16 %v437
        %v494 = vunpack.c.l.b16 %v438
        %v495 = vunpack.c.h.b16 %v438
        %v496 = vunpack.c.l.b16 %v439
        %v497 = vunpack.c.h.b16 %v439
        %v498 = vunpack.c.l.b16 %v440
        %v499 = vunpack.c.h.b16 %v440
        %v500 = vunpack.c.l.b16 %v441
        %v501 = vunpack.c.h.b16 %v441
        %v502 = vpack.c.b16 %v472, %v470
        %v503 = vpack.c.b16 %v473, %v471
        %v504 = vpack.c.b16 %v476, %v474
        %v505 = vpack.c.b16 %v477, %v475
        %v506 = vpack.c.b16 %v480, %v478
        %v507 = vpack.c.b16 %v481, %v479
        %v508 = vpack.c.b16 %v484, %v482
        %v509 = vpack.c.b16 %v485, %v483
        %v510 = vpack.c.b16 %v488, %v486
        %v511 = vpack.c.b16 %v489, %v487
        %v512 = vpack.c.b16 %v492, %v490
        %v513 = vpack.c.b16 %v493, %v491
        %v514 = vpack.c.b16 %v496, %v494
        %v515 = vpack.c.b16 %v497, %v495
        %v516 = vpack.c.b16 %v500, %v498
        %v517 = vpack.c.b16 %v501, %v499
        %534 = vmatprep.subr.bf16.mxu0 %v503
        %535 = vmatpush1.bf16.msra.mxu0 %v502
        %536 = vmatprep.subr.bf16.mxu0 %v505
        %537 = vmatpush1.bf16.msra.mxu0 %v504
        %538 = vmatprep.subr.bf16.mxu0 %v507
        %539 = vmatpush1.bf16.msra.mxu0 %v506
        %540 = vmatprep.subr.bf16.mxu0 %v509
        %541 = vmatpush1.bf16.msra.mxu0 %v508
        %542 = vmatprep.subr.bf16.mxu0 %v511
        %543 = vmatpush1.bf16.msra.mxu0 %v510
        %544 = vmatprep.subr.bf16.mxu0 %v513
        %545 = vmatpush1.bf16.msra.mxu0 %v512
        %546 = vmatprep.subr.bf16.mxu0 %v515
        %547 = vmatpush1.bf16.msra.mxu0 %v514
        %548 = vmatprep.subr.bf16.mxu0 %v517
        %549 = vmatpush1.bf16.msra.mxu0 %v516
        %550 = vmatprep.subr.bf16.mxu0 0
        %551 = vmatpush1.bf16.msra.mxu0 0
        %552 = vmatprep.subr.bf16.mxu0 0
        %553 = vmatpush1.bf16.msra.mxu0 0
        %554 = vmatprep.subr.bf16.mxu0 0
        %555 = vmatpush1.bf16.msra.mxu0 0
        %556 = vmatprep.subr.bf16.mxu0 0
        %557 = vmatpush1.bf16.msra.mxu0 0
        %558 = vmatprep.subr.bf16.mxu0 0
        %559 = vmatpush1.bf16.msra.mxu0 0
        %560 = vmatprep.subr.bf16.mxu0 0
        %561 = vmatpush1.bf16.msra.mxu0 0
        %562 = vmatprep.subr.bf16.mxu0 0
        %563 = vmatpush1.bf16.msra.mxu0 0
        %564 = vmatprep.subr.bf16.mxu0 0
        %565 = vmatpush1.bf16.msra.mxu0 0
        %566 = vmatprep.mubr.bf16.mxu0 0
        %567 = vmatmul.mubr.bf16.gmra.mrb[0].mxu0 %v410
        %v568 = vpop.f32.mrb[0].mxu0
        %v569 = vadd.f32 %v447, %v568
        %v570 = vpop.f32.mrb[0].mxu0
        %v571 = vadd.f32 %v451, %v570
        %v572 = vpop.f32.mrb[0].mxu0
        %v573 = vadd.f32 %v447, %v572
        %v574 = vpop.f32.mrb[0].mxu0
        %v575 = vadd.f32 %v451, %v574
        %576 = vmatprep.mubr.bf16.mxu0 0
        %577 = vmatmul.mubr.bf16.gmra.mrb[0].mxu0 %v411
        %v578 = vpop.f32.mrb[0].mxu0
        %v579 = vadd.f32 %v447, %v578
        %v580 = vpop.f32.mrb[0].mxu0
        %v581 = vadd.f32 %v451, %v580
        %v582 = vpop.f32.mrb[0].mxu0
        %v583 = vadd.f32 %v447, %v582
        %v584 = vpop.f32.mrb[0].mxu0
        %v585 = vadd.f32 %v451, %v584
        %586 = vmatprep.mubr.bf16.mxu0 0
        %587 = vmatmul.mubr.bf16.gmra.mrb[0].mxu0 %v412
        %v588 = vpop.f32.mrb[0].mxu0
        %v589 = vadd.f32 %v447, %v588
        %v590 = vpop.f32.mrb[0].mxu0
        %v591 = vadd.f32 %v451, %v590
        %v592 = vpop.f32.mrb[0].mxu0
        %v593 = vadd.f32 %v447, %v592
        %v594 = vpop.f32.mrb[0].mxu0
        %v595 = vadd.f32 %v451, %v594
        %596 = vmatprep.mubr.bf16.mxu0 0
        %597 = vmatmul.mubr.bf16.gmra.mrb[0].mxu0 %v413
        %v598 = vpop.f32.mrb[0].mxu0
        %v599 = vadd.f32 %v447, %v598
        %v600 = vpop.f32.mrb[0].mxu0
        %v601 = vadd.f32 %v451, %v600
        %v602 = vpop.f32.mrb[0].mxu0
        %v603 = vadd.f32 %v447, %v602
        %v604 = vpop.f32.mrb[0].mxu0
        %v605 = vadd.f32 %v451, %v604
        %606 = vmatprep.mubr.bf16.mxu0 0
        %607 = vmatmul.mubr.bf16.gmra.mrb[0].mxu0 %v414
        %v608 = vpop.f32.mrb[0].mxu0
        %v609 = vadd.f32 %v447, %v608
        %v610 = vpop.f32.mrb[0].mxu0
        %v611 = vadd.f32 %v451, %v610
        %v612 = vpop.f32.mrb[0].mxu0
        %v613 = vadd.f32 %v447, %v612
        %v614 = vpop.f32.mrb[0].mxu0
        %v615 = vadd.f32 %v451, %v614
        %616 = vmatprep.mubr.bf16.mxu0 0
        %617 = vmatmul.mubr.bf16.gmra.mrb[0].mxu0 %v415
        %v618 = vpop.f32.mrb[0].mxu0
        %v619 = vadd.f32 %v447, %v618
        %v620 = vpop.f32.mrb[0].mxu0
        %v621 = vadd.f32 %v451, %v620
        %v622 = vpop.f32.mrb[0].mxu0
        %v623 = vadd.f32 %v447, %v622
        %v624 = vpop.f32.mrb[0].mxu0
        %v625 = vadd.f32 %v451, %v624
        %626 = vmatprep.mubr.bf16.mxu0 0
        %627 = vmatmul.mubr.bf16.gmra.mrb[0].mxu0 %v416
        %v628 = vpop.f32.mrb[0].mxu0
        %v629 = vadd.f32 %v447, %v628
        %v630 = vpop.f32.mrb[0].mxu0
        %v631 = vadd.f32 %v451, %v630
        %v632 = vpop.f32.mrb[0].mxu0
        %v633 = vadd.f32 %v447, %v632
        %v634 = vpop.f32.mrb[0].mxu0
        %v635 = vadd.f32 %v451, %v634
        %636 = vmatprep.mubr.bf16.mxu0 0
        %637 = vmatmul.mubr.bf16.gmra.mrb[0].mxu0 %v417
        %v638 = vpop.f32.mrb[0].mxu0
        %v639 = vadd.f32 %v447, %v638
        %v640 = vpop.f32.mrb[0].mxu0
        %v641 = vadd.f32 %v451, %v640
        %v642 = vpop.f32.mrb[0].mxu0
        %v643 = vadd.f32 %v447, %v642
        %v644 = vpop.f32.mrb[0].mxu0
        %v645 = vadd.f32 %v451, %v644
        %646 = vmatprep.mubr.bf16.mxu0 0
        %647 = vmatmul.mubr.bf16.gmra.mrb[0].mxu0 %v418
        %v648 = vpop.f32.mrb[0].mxu0
        %v649 = vadd.f32 %v447, %v648
        %v650 = vpop.f32.mrb[0].mxu0
        %v651 = vadd.f32 %v451, %v650
        %v652 = vpop.f32.mrb[0].mxu0
        %v653 = vadd.f32 %v447, %v652
        %v654 = vpop.f32.mrb[0].mxu0
        %v655 = vadd.f32 %v451, %v654
        %656 = vmatprep.mubr.bf16.mxu0 0
        %657 = vmatmul.mubr.bf16.gmra.mrb[0].mxu0 %v419
        %v658 = vpop.f32.mrb[0].mxu0
        %v659 = vadd.f32 %v447, %v658
        %v660 = vpop.f32.mrb[0].mxu0
        %v661 = vadd.f32 %v451, %v660
        %v662 = vpop.f32.mrb[0].mxu0
        %v663 = vadd.f32 %v447, %v662
        %v664 = vpop.f32.mrb[0].mxu0
        %v665 = vadd.f32 %v451, %v664
        %666 = vmatprep.mubr.bf16.mxu0 0
        %667 = vmatmul.mubr.bf16.gmra.mrb[0].mxu0 %v420
        %v668 = vpop.f32.mrb[0].mxu0
        %v669 = vadd.f32 %v447, %v668
        %v670 = vpop.f32.mrb[0].mxu0
        %v671 = vadd.f32 %v451, %v670
        %v672 = vpop.f32.mrb[0].mxu0
        %v673 = vadd.f32 %v447, %v672
        %v674 = vpop.f32.mrb[0].mxu0
        %v675 = vadd.f32 %v451, %v674
        %676 = vmatprep.mubr.bf16.mxu0 0
        %677 = vmatmul.mubr.bf16.gmra.mrb[0].mxu0 %v421
        %v678 = vpop.f32.mrb[0].mxu0
        %v679 = vadd.f32 %v447, %v678
        %v680 = vpop.f32.mrb[0].mxu0
        %v681 = vadd.f32 %v451, %v680
        %v682 = vpop.f32.mrb[0].mxu0
        %v683 = vadd.f32 %v447, %v682
        %v684 = vpop.f32.mrb[0].mxu0
        %v685 = vadd.f32 %v451, %v684
        %686 = vmatprep.mubr.bf16.mxu0 0
        %687 = vmatmul.mubr.bf16.gmra.mrb[0].mxu0 %v422
        %v688 = vpop.f32.mrb[0].mxu0
        %v689 = vadd.f32 %v447, %v688
        %v690 = vpop.f32.mrb[0].mxu0
        %v691 = vadd.f32 %v451, %v690
        %v692 = vpop.f32.mrb[0].mxu0
        %v693 = vadd.f32 %v447, %v692
        %v694 = vpop.f32.mrb[0].mxu0
        %v695 = vadd.f32 %v451, %v694
        %696 = vmatprep.mubr.bf16.mxu0 0
        %697 = vmatmul.mubr.bf16.gmra.mrb[0].mxu0 %v423
        %v698 = vpop.f32.mrb[0].mxu0
        %v699 = vadd.f32 %v447, %v698
        %v700 = vpop.f32.mrb[0].mxu0
        %v701 = vadd.f32 %v451, %v700
        %v702 = vpop.f32.mrb[0].mxu0
        %v703 = vadd.f32 %v447, %v702
        %v704 = vpop.f32.mrb[0].mxu0
        %v705 = vadd.f32 %v451, %v704
        %706 = vmatprep.mubr.bf16.mxu0 0
        %707 = vmatmul.mubr.bf16.gmra.mrb[0].mxu0 %v424
        %v708 = vpop.f32.mrb[0].mxu0
        %v709 = vadd.f32 %v447, %v708
        %v710 = vpop.f32.mrb[0].mxu0
        %v711 = vadd.f32 %v451, %v710
        %v712 = vpop.f32.mrb[0].mxu0
        %v713 = vadd.f32 %v447, %v712
        %v714 = vpop.f32.mrb[0].mxu0
        %v715 = vadd.f32 %v451, %v714
        %716 = vmatprep.mubr.bf16.mxu0 0
        %717 = vmatmul.mubr.bf16.gmra.mrb[0].mxu0 %v425
        %v718 = vpop.f32.mrb[0].mxu0
        %v719 = vadd.f32 %v447, %v718
        %v720 = vpop.f32.mrb[0].mxu0
        %v721 = vadd.f32 %v451, %v720
        %v722 = vpop.f32.mrb[0].mxu0
        %v723 = vadd.f32 %v447, %v722
        %v724 = vpop.f32.mrb[0].mxu0
        %v725 = vadd.f32 %v451, %v724
        %726 = vdwg.mxu0
        %v727 = vmax.f32 %v569, 0.0
        %v728 = vmax.f32 %v571, 0.0
        %v729 = vmax.f32 %v573, 0.0
        %v730 = vmax.f32 %v575, 0.0
        %v731 = vmax.f32 %v579, 0.0
        %v732 = vmax.f32 %v581, 0.0
        %v733 = vmax.f32 %v583, 0.0
        %v734 = vmax.f32 %v585, 0.0
        %v735 = vmax.f32 %v589, 0.0
        %v736 = vmax.f32 %v591, 0.0
        %v737 = vmax.f32 %v593, 0.0
        %v738 = vmax.f32 %v595, 0.0
        %v739 = vmax.f32 %v599, 0.0
        %v740 = vmax.f32 %v601, 0.0
        %v741 = vmax.f32 %v603, 0.0
        %v742 = vmax.f32 %v605, 0.0
        %v743 = vmax.f32 %v609, 0.0
        %v744 = vmax.f32 %v611, 0.0
        %v745 = vmax.f32 %v613, 0.0
        %v746 = vmax.f32 %v615, 0.0
        %v747 = vmax.f32 %v619, 0.0
        %v748 = vmax.f32 %v621, 0.0
        %v749 = vmax.f32 %v623, 0.0
        %v750 = vmax.f32 %v625, 0.0
        %v751 = vmax.f32 %v629, 0.0
        %v752 = vmax.f32 %v631, 0.0
        %v753 = vmax.f32 %v633, 0.0
        %v754 = vmax.f32 %v635, 0.0
        %v755 = vmax.f32 %v639, 0.0
        %v756 = vmax.f32 %v641, 0.0
        %v757 = vmax.f32 %v643, 0.0
        %v758 = vmax.f32 %v645, 0.0
        %v759 = vmax.f32 %v649, 0.0
        %v760 = vmax.f32 %v651, 0.0
        %v761 = vmax.f32 %v653, 0.0
        %v762 = vmax.f32 %v655, 0.0
        %v763 = vmax.f32 %v659, 0.0
        %v764 = vmax.f32 %v661, 0.0
        %v765 = vmax.f32 %v663, 0.0
        %v766 = vmax.f32 %v665, 0.0
        %v767 = vmax.f32 %v669, 0.0
        %v768 = vmax.f32 %v671, 0.0
        %v769 = vmax.f32 %v673, 0.0
        %v770 = vmax.f32 %v675, 0.0
        %v771 = vmax.f32 %v679, 0.0
        %v772 = vmax.f32 %v681, 0.0
        %v773 = vmax.f32 %v683, 0.0
        %v774 = vmax.f32 %v685, 0.0
        %v775 = vmax.f32 %v689, 0.0
        %v776 = vmax.f32 %v691, 0.0
        %v777 = vmax.f32 %v693, 0.0
        %v778 = vmax.f32 %v695, 0.0
        %v779 = vmax.f32 %v699, 0.0
        %v780 = vmax.f32 %v701, 0.0
        %v781 = vmax.f32 %v703, 0.0
        %v782 = vmax.f32 %v705, 0.0
        %v783 = vmax.f32 %v709, 0.0
        %v784 = vmax.f32 %v711, 0.0
        %v785 = vmax.f32 %v713, 0.0
        %v786 = vmax.f32 %v715, 0.0
        %v787 = vmax.f32 %v719, 0.0
        %v788 = vmax.f32 %v721, 0.0
        %v789 = vmax.f32 %v723, 0.0
        %v790 = vmax.f32 %v725, 0.0
        %v791 = vpack.c.bf16 %v729, %v727
        %v792 = vpack.c.bf16 %v730, %v728
        %v793 = vpack.c.bf16 %v733, %v731
        %v794 = vpack.c.bf16 %v734, %v732
        %v795 = vpack.c.bf16 %v737, %v735
        %v796 = vpack.c.bf16 %v738, %v736
        %v797 = vpack.c.bf16 %v741, %v739
        %v798 = vpack.c.bf16 %v742, %v740
        %v799 = vpack.c.bf16 %v745, %v743
        %v800 = vpack.c.bf16 %v746, %v744
        %v801 = vpack.c.bf16 %v749, %v747
        %v802 = vpack.c.bf16 %v750, %v748
        %v803 = vpack.c.bf16 %v753, %v751
        %v804 = vpack.c.bf16 %v754, %v752
        %v805 = vpack.c.bf16 %v757, %v755
        %v806 = vpack.c.bf16 %v758, %v756
        %v807 = vpack.c.bf16 %v761, %v759
        %v808 = vpack.c.bf16 %v762, %v760
        %v809 = vpack.c.bf16 %v765, %v763
        %v810 = vpack.c.bf16 %v766, %v764
        %v811 = vpack.c.bf16 %v769, %v767
        %v812 = vpack.c.bf16 %v770, %v768
        %v813 = vpack.c.bf16 %v773, %v771
        %v814 = vpack.c.bf16 %v774, %v772
        %v815 = vpack.c.bf16 %v777, %v775
        %v816 = vpack.c.bf16 %v778, %v776
        %v817 = vpack.c.bf16 %v781, %v779
        %v818 = vpack.c.bf16 %v782, %v780
        %v819 = vpack.c.bf16 %v785, %v783
        %v820 = vpack.c.bf16 %v786, %v784
        %v821 = vpack.c.bf16 %v789, %v787
        %v822 = vpack.c.bf16 %v790, %v788
        %v823 = vld [vmem:[#allocation8] sm:$0xf]
        %v824 = vld [vmem:[#allocation8 + $0x4] sm:$0xf]
        %v825 = vld [vmem:[#allocation8 + $0x8] sm:$0xf]
        %v826 = vld [vmem:[#allocation8 + $0xc] sm:$0xf]
        %v827 = vld [vmem:[#allocation8 + $0x10] sm:$0xf]
        %v828 = vld [vmem:[#allocation8 + $0x14] sm:$0xf]
        %v829 = vld [vmem:[#allocation8 + $0x18] sm:$0xf]
        %v830 = vld [vmem:[#allocation8 + $0x1c] sm:$0xf]
        %v831 = vld [vmem:[#allocation8 + $0x20] sm:$0xf]
        %v832 = vld [vmem:[#allocation8 + $0x24] sm:$0xf]
        %v833 = vld [vmem:[#allocation8 + $0x28] sm:$0xf]
        %v834 = vld [vmem:[#allocation8 + $0x2c] sm:$0xf]
        %v835 = vld [vmem:[#allocation8 + $0x30] sm:$0xf]
        %v836 = vld [vmem:[#allocation8 + $0x34] sm:$0xf]
        %v837 = vld [vmem:[#allocation8 + $0x38] sm:$0xf]
        %v838 = vld [vmem:[#allocation8 + $0x3c] sm:$0xf]
        %v839 = vld [vmem:[#allocation8 + $0x40] sm:$0xf]
        %v840 = vld [vmem:[#allocation8 + $0x44] sm:$0xf]
        %v841 = vld [vmem:[#allocation8 + $0x48] sm:$0xf]
        %v842 = vld [vmem:[#allocation8 + $0x4c] sm:$0xf]
        %v843 = vld [vmem:[#allocation8 + $0x50] sm:$0xf]
        %v844 = vld [vmem:[#allocation8 + $0x54] sm:$0xf]
        %v845 = vld [vmem:[#allocation8 + $0x58] sm:$0xf]
        %v846 = vld [vmem:[#allocation8 + $0x5c] sm:$0xf]
        %v847 = vld [vmem:[#allocation8 + $0x60] sm:$0xf]
        %v848 = vld [vmem:[#allocation8 + $0x64] sm:$0xf]
        %v849 = vld [vmem:[#allocation8 + $0x68] sm:$0xf]
        %v850 = vld [vmem:[#allocation8 + $0x6c] sm:$0xf]
        %v851 = vld [vmem:[#allocation8 + $0x70] sm:$0xf]
        %v852 = vld [vmem:[#allocation8 + $0x74] sm:$0xf]
        %v853 = vld [vmem:[#allocation8 + $0x78] sm:$0xf]
        %v854 = vld [vmem:[#allocation8 + $0x7c] sm:$0xf]
        %v887 = vunpack.c.l.b16 %v823
        %v888 = vunpack.c.l.b16 %v824
        %v889 = vunpack.c.l.b16 %v825
        %v890 = vunpack.c.l.b16 %v826
        %v891 = vunpack.c.l.b16 %v827
        %v892 = vunpack.c.l.b16 %v828
        %v893 = vunpack.c.l.b16 %v829
        %v894 = vunpack.c.l.b16 %v830
        %v895 = vunpack.c.l.b16 %v831
        %v896 = vunpack.c.l.b16 %v832
        %v897 = vunpack.c.l.b16 %v833
        %v898 = vunpack.c.l.b16 %v834
        %v899 = vunpack.c.l.b16 %v835
        %v900 = vunpack.c.l.b16 %v836
        %v901 = vunpack.c.l.b16 %v837
        %v902 = vunpack.c.l.b16 %v838
        %v903 = vunpack.c.l.b16 %v839
        %v904 = vunpack.c.l.b16 %v840
        %v905 = vunpack.c.l.b16 %v841
        %v906 = vunpack.c.l.b16 %v842
        %v907 = vunpack.c.l.b16 %v843
        %v908 = vunpack.c.l.b16 %v844
        %v909 = vunpack.c.l.b16 %v845
        %v910 = vunpack.c.l.b16 %v846
        %v911 = vunpack.c.l.b16 %v847
        %v912 = vunpack.c.l.b16 %v848
        %v913 = vunpack.c.l.b16 %v849
        %v914 = vunpack.c.l.b16 %v850
        %v915 = vunpack.c.l.b16 %v851
        %v916 = vunpack.c.l.b16 %v852
        %v917 = vunpack.c.l.b16 %v853
        %v918 = vunpack.c.l.b16 %v854
        %v919 = vpack.c.b16 %v888, %v887
        %v920 = vpack.c.b16 %v890, %v889
        %v921 = vpack.c.b16 %v892, %v891
        %v922 = vpack.c.b16 %v894, %v893
        %v923 = vpack.c.b16 %v896, %v895
        %v924 = vpack.c.b16 %v898, %v897
        %v925 = vpack.c.b16 %v900, %v899
        %v926 = vpack.c.b16 %v902, %v901
        %v927 = vpack.c.b16 %v904, %v903
        %v928 = vpack.c.b16 %v906, %v905
        %v929 = vpack.c.b16 %v908, %v907
        %v930 = vpack.c.b16 %v910, %v909
        %v931 = vpack.c.b16 %v912, %v911
        %v932 = vpack.c.b16 %v914, %v913
        %v933 = vpack.c.b16 %v916, %v915
        %v934 = vpack.c.b16 %v918, %v917
        %951 = vmatprep.subr.bf16.mxu0 0
        %952 = vmatpush1.bf16.msra.mxu0 %v919
        %953 = vmatprep.subr.bf16.mxu0 0
        %954 = vmatpush1.bf16.msra.mxu0 %v920
        %955 = vmatprep.subr.bf16.mxu0 0
        %956 = vmatpush1.bf16.msra.mxu0 %v921
        %957 = vmatprep.subr.bf16.mxu0 0
        %958 = vmatpush1.bf16.msra.mxu0 %v922
        %959 = vmatprep.subr.bf16.mxu0 0
        %960 = vmatpush1.bf16.msra.mxu0 %v923
        %961 = vmatprep.subr.bf16.mxu0 0
        %962 = vmatpush1.bf16.msra.mxu0 %v924
        %963 = vmatprep.subr.bf16.mxu0 0
        %964 = vmatpush1.bf16.msra.mxu0 %v925
        %965 = vmatprep.subr.bf16.mxu0 0
        %966 = vmatpush1.bf16.msra.mxu0 %v926
        %967 = vmatprep.subr.bf16.mxu0 0
        %968 = vmatpush1.bf16.msra.mxu0 %v927
        %969 = vmatprep.subr.bf16.mxu0 0
        %970 = vmatpush1.bf16.msra.mxu0 %v928
        %971 = vmatprep.subr.bf16.mxu0 0
        %972 = vmatpush1.bf16.msra.mxu0 %v929
        %973 = vmatprep.subr.bf16.mxu0 0
        %974 = vmatpush1.bf16.msra.mxu0 %v930
        %975 = vmatprep.subr.bf16.mxu0 0
        %976 = vmatpush1.bf16.msra.mxu0 %v931
        %977 = vmatprep.subr.bf16.mxu0 0
        %978 = vmatpush1.bf16.msra.mxu0 %v932
        %979 = vmatprep.subr.bf16.mxu0 0
        %980 = vmatpush1.bf16.msra.mxu0 %v933
        %981 = vmatprep.subr.bf16.mxu0 0
        %982 = vmatpush1.bf16.msra.mxu0 %v934
        %983 = vmatprep.mubr.bf16.mxu0 %v792
        %984 = vmatmul.mubr.bf16.gmra.mrb[0].mxu0 %v791
        %v985 = vpop.f32.mrb[0].mxu0
        %v986 = vadd.f32 0.0, %v985
        %v987 = vpop.f32.mrb[0].mxu0
        %v988 = vpop.f32.mrb[0].mxu0
        %v989 = vadd.f32 0.0, %v988
        %v990 = vpop.f32.mrb[0].mxu0
        %991 = vmatprep.mubr.bf16.mxu0 %v794
        %992 = vmatmul.mubr.bf16.gmra.mrb[0].mxu0 %v793
        %v993 = vpop.f32.mrb[0].mxu0
        %v994 = vadd.f32 0.0, %v993
        %v995 = vpop.f32.mrb[0].mxu0
        %v996 = vpop.f32.mrb[0].mxu0
        %v997 = vadd.f32 0.0, %v996
        %v998 = vpop.f32.mrb[0].mxu0
        %999 = vmatprep.mubr.bf16.mxu0 %v796
        %1000 = vmatmul.mubr.bf16.gmra.mrb[0].mxu0 %v795
        %v1001 = vpop.f32.mrb[0].mxu0
        %v1002 = vadd.f32 0.0, %v1001
        %v1003 = vpop.f32.mrb[0].mxu0
        %v1004 = vpop.f32.mrb[0].mxu0
        %v1005 = vadd.f32 0.0, %v1004
        %v1006 = vpop.f32.mrb[0].mxu0
        %1007 = vmatprep.mubr.bf16.mxu0 %v798
        %1008 = vmatmul.mubr.bf16.gmra.mrb[0].mxu0 %v797
        %v1009 = vpop.f32.mrb[0].mxu0
        %v1010 = vadd.f32 0.0, %v1009
        %v1011 = vpop.f32.mrb[0].mxu0
        %v1012 = vpop.f32.mrb[0].mxu0
        %v1013 = vadd.f32 0.0, %v1012
        %v1014 = vpop.f32.mrb[0].mxu0
        %1015 = vmatprep.mubr.bf16.mxu0 %v800
        %1016 = vmatmul.mubr.bf16.gmra.mrb[0].mxu0 %v799
        %v1017 = vpop.f32.mrb[0].mxu0
        %v1018 = vadd.f32 0.0, %v1017
        %v1019 = vpop.f32.mrb[0].mxu0
        %v1020 = vpop.f32.mrb[0].mxu0
        %v1021 = vadd.f32 0.0, %v1020
        %v1022 = vpop.f32.mrb[0].mxu0
        %1023 = vmatprep.mubr.bf16.mxu0 %v802
        %1024 = vmatmul.mubr.bf16.gmra.mrb[0].mxu0 %v801
        %v1025 = vpop.f32.mrb[0].mxu0
        %v1026 = vadd.f32 0.0, %v1025
        %v1027 = vpop.f32.mrb[0].mxu0
        %v1028 = vpop.f32.mrb[0].mxu0
        %v1029 = vadd.f32 0.0, %v1028
        %v1030 = vpop.f32.mrb[0].mxu0
        %1031 = vmatprep.mubr.bf16.mxu0 %v804
        %1032 = vmatmul.mubr.bf16.gmra.mrb[0].mxu0 %v803
        %v1033 = vpop.f32.mrb[0].mxu0
        %v1034 = vadd.f32 0.0, %v1033
        %v1035 = vpop.f32.mrb[0].mxu0
        %v1036 = vpop.f32.mrb[0].mxu0
        %v1037 = vadd.f32 0.0, %v1036
        %v1038 = vpop.f32.mrb[0].mxu0
        %1039 = vmatprep.mubr.bf16.mxu0 %v806
        %1040 = vmatmul.mubr.bf16.gmra.mrb[0].mxu0 %v805
        %v1041 = vpop.f32.mrb[0].mxu0
        %v1042 = vadd.f32 0.0, %v1041
        %v1043 = vpop.f32.mrb[0].mxu0
        %v1044 = vpop.f32.mrb[0].mxu0
        %v1045 = vadd.f32 0.0, %v1044
        %v1046 = vpop.f32.mrb[0].mxu0
        %1047 = vmatprep.mubr.bf16.mxu0 %v808
        %1048 = vmatmul.mubr.bf16.gmra.mrb[0].mxu0 %v807
        %v1049 = vpop.f32.mrb[0].mxu0
        %v1050 = vadd.f32 0.0, %v1049
        %v1051 = vpop.f32.mrb[0].mxu0
        %v1052 = vpop.f32.mrb[0].mxu0
        %v1053 = vadd.f32 0.0, %v1052
        %v1054 = vpop.f32.mrb[0].mxu0
        %1055 = vmatprep.mubr.bf16.mxu0 %v810
        %1056 = vmatmul.mubr.bf16.gmra.mrb[0].mxu0 %v809
        %v1057 = vpop.f32.mrb[0].mxu0
        %v1058 = vadd.f32 0.0, %v1057
        %v1059 = vpop.f32.mrb[0].mxu0
        %v1060 = vpop.f32.mrb[0].mxu0
        %v1061 = vadd.f32 0.0, %v1060
        %v1062 = vpop.f32.mrb[0].mxu0
        %1063 = vmatprep.mubr.bf16.mxu0 %v812
        %1064 = vmatmul.mubr.bf16.gmra.mrb[0].mxu0 %v811
        %v1065 = vpop.f32.mrb[0].mxu0
        %v1066 = vadd.f32 0.0, %v1065
        %v1067 = vpop.f32.mrb[0].mxu0
        %v1068 = vpop.f32.mrb[0].mxu0
        %v1069 = vadd.f32 0.0, %v1068
        %v1070 = vpop.f32.mrb[0].mxu0
        %1071 = vmatprep.mubr.bf16.mxu0 %v814
        %1072 = vmatmul.mubr.bf16.gmra.mrb[0].mxu0 %v813
        %v1073 = vpop.f32.mrb[0].mxu0
        %v1074 = vadd.f32 0.0, %v1073
        %v1075 = vpop.f32.mrb[0].mxu0
        %v1076 = vpop.f32.mrb[0].mxu0
        %v1077 = vadd.f32 0.0, %v1076
        %v1078 = vpop.f32.mrb[0].mxu0
        %1079 = vmatprep.mubr.bf16.mxu0 %v816
        %1080 = vmatmul.mubr.bf16.gmra.mrb[0].mxu0 %v815
        %v1081 = vpop.f32.mrb[0].mxu0
        %v1082 = vadd.f32 0.0, %v1081
        %v1083 = vpop.f32.mrb[0].mxu0
        %v1084 = vpop.f32.mrb[0].mxu0
        %v1085 = vadd.f32 0.0, %v1084
        %v1086 = vpop.f32.mrb[0].mxu0
        %1087 = vmatprep.mubr.bf16.mxu0 %v818
        %1088 = vmatmul.mubr.bf16.gmra.mrb[0].mxu0 %v817
        %v1089 = vpop.f32.mrb[0].mxu0
        %v1090 = vadd.f32 0.0, %v1089
        %v1091 = vpop.f32.mrb[0].mxu0
        %v1092 = vpop.f32.mrb[0].mxu0
        %v1093 = vadd.f32 0.0, %v1092
        %v1094 = vpop.f32.mrb[0].mxu0
        %1095 = vmatprep.mubr.bf16.mxu0 %v820
        %1096 = vmatmul.mubr.bf16.gmra.mrb[0].mxu0 %v819
        %v1097 = vpop.f32.mrb[0].mxu0
        %v1098 = vadd.f32 0.0, %v1097
        %v1099 = vpop.f32.mrb[0].mxu0
        %v1100 = vpop.f32.mrb[0].mxu0
        %v1101 = vadd.f32 0.0, %v1100
        %v1102 = vpop.f32.mrb[0].mxu0
        %1103 = vmatprep.mubr.bf16.mxu0 %v822
        %1104 = vmatmul.mubr.bf16.gmra.mrb[0].mxu0 %v821
        %v1105 = vpop.f32.mrb[0].mxu0
        %v1106 = vadd.f32 0.0, %v1105
        %v1107 = vpop.f32.mrb[0].mxu0
        %v1108 = vpop.f32.mrb[0].mxu0
        %v1109 = vadd.f32 0.0, %v1108
        %v1110 = vpop.f32.mrb[0].mxu0
        %1111 = vdwg.mxu0
        %p1112 = scmp.eq.s32.totalorder %s30, 0
        // Predicated region
        $region61: #{tpu_custom_call.1} parent=47 // pred_check
          %p1113 = pneg %p1112
        $region62: #{tpu_custom_call.1} parent=47 // pred_check_branch
          %1115 = sbr.rel (%p1113) target = $region64
        $region63: #{tpu_custom_call.1} parent=47 // pred_region
          %1116 = vst [vmem:[#allocation2] sm:$0xff] %v986
          %1117 = vst [vmem:[#allocation2 + $0x8] sm:$0xff] %v989
          %1118 = vst [vmem:[#allocation2 + $0x10] sm:$0xff] %v994
          %1119 = vst [vmem:[#allocation2 + $0x18] sm:$0xff] %v997
          %1120 = vst [vmem:[#allocation2 + $0x20] sm:$0xff] %v1002
          %1121 = vst [vmem:[#allocation2 + $0x28] sm:$0xff] %v1005
          %1122 = vst [vmem:[#allocation2 + $0x30] sm:$0xff] %v1010
          %1123 = vst [vmem:[#allocation2 + $0x38] sm:$0xff] %v1013
          %1124 = vst [vmem:[#allocation2 + $0x40] sm:$0xff] %v1018
          %1125 = vst [vmem:[#allocation2 + $0x48] sm:$0xff] %v1021
          %1126 = vst [vmem:[#allocation2 + $0x50] sm:$0xff] %v1026
          %1127 = vst [vmem:[#allocation2 + $0x58] sm:$0xff] %v1029
          %1128 = vst [vmem:[#allocation2 + $0x60] sm:$0xff] %v1034
          %1129 = vst [vmem:[#allocation2 + $0x68] sm:$0xff] %v1037
          %1130 = vst [vmem:[#allocation2 + $0x70] sm:$0xff] %v1042
          %1131 = vst [vmem:[#allocation2 + $0x78] sm:$0xff] %v1045
          %1132 = vst [vmem:[#allocation2 + $0x80] sm:$0xff] %v1050
          %1133 = vst [vmem:[#allocation2 + $0x88] sm:$0xff] %v1053
          %1134 = vst [vmem:[#allocation2 + $0x90] sm:$0xff] %v1058
          %1135 = vst [vmem:[#allocation2 + $0x98] sm:$0xff] %v1061
          %1136 = vst [vmem:[#allocation2 + $0xa0] sm:$0xff] %v1066
          %1137 = vst [vmem:[#allocation2 + $0xa8] sm:$0xff] %v1069
          %1138 = vst [vmem:[#allocation2 + $0xb0] sm:$0xff] %v1074
          %1139 = vst [vmem:[#allocation2 + $0xb8] sm:$0xff] %v1077
          %1140 = vst [vmem:[#allocation2 + $0xc0] sm:$0xff] %v1082
          %1141 = vst [vmem:[#allocation2 + $0xc8] sm:$0xff] %v1085
          %1142 = vst [vmem:[#allocation2 + $0xd0] sm:$0xff] %v1090
          %1143 = vst [vmem:[#allocation2 + $0xd8] sm:$0xff] %v1093
          %1144 = vst [vmem:[#allocation2 + $0xe0] sm:$0xff] %v1098
          %1145 = vst [vmem:[#allocation2 + $0xe8] sm:$0xff] %v1101
          %1146 = vst [vmem:[#allocation2 + $0xf0] sm:$0xff] %v1106
          %1147 = vst [vmem:[#allocation2 + $0xf8] sm:$0xff] %v1109
        $region64: #{tpu_custom_call.1} parent=47 // pred_fallthru
          _
        %p1148 = scmp.gt.s32.totalorder %s30, 0
        // Predicated region
        $region65: #{tpu_custom_call.1} parent=47 // pred_check
          %p1149 = pneg %p1148
        $region66: #{tpu_custom_call.1} parent=47 // pred_check_branch
          %1151 = sbr.rel (%p1149) target = $region68
        $region67: #{tpu_custom_call.1} parent=47 // pred_region
          %v1152 = vld [vmem:[#allocation2] sm:$0xff]
          %v1153 = vld [vmem:[#allocation2 + $0x8] sm:$0xff]
          %v1154 = vld [vmem:[#allocation2 + $0x10] sm:$0xff]
          %v1155 = vld [vmem:[#allocation2 + $0x18] sm:$0xff]
          %v1156 = vld [vmem:[#allocation2 + $0x20] sm:$0xff]
          %v1157 = vld [vmem:[#allocation2 + $0x28] sm:$0xff]
          %v1158 = vld [vmem:[#allocation2 + $0x30] sm:$0xff]
          %v1159 = vld [vmem:[#allocation2 + $0x38] sm:$0xff]
          %v1160 = vld [vmem:[#allocation2 + $0x40] sm:$0xff]
          %v1161 = vld [vmem:[#allocation2 + $0x48] sm:$0xff]
          %v1162 = vld [vmem:[#allocation2 + $0x50] sm:$0xff]
          %v1163 = vld [vmem:[#allocation2 + $0x58] sm:$0xff]
          %v1164 = vld [vmem:[#allocation2 + $0x60] sm:$0xff]
          %v1165 = vld [vmem:[#allocation2 + $0x68] sm:$0xff]
          %v1166 = vld [vmem:[#allocation2 + $0x70] sm:$0xff]
          %v1167 = vld [vmem:[#allocation2 + $0x78] sm:$0xff]
          %v1168 = vld [vmem:[#allocation2 + $0x80] sm:$0xff]
          %v1169 = vld [vmem:[#allocation2 + $0x88] sm:$0xff]
          %v1170 = vld [vmem:[#allocation2 + $0x90] sm:$0xff]
          %v1171 = vld [vmem:[#allocation2 + $0x98] sm:$0xff]
          %v1172 = vld [vmem:[#allocation2 + $0xa0] sm:$0xff]
          %v1173 = vld [vmem:[#allocation2 + $0xa8] sm:$0xff]
          %v1174 = vld [vmem:[#allocation2 + $0xb0] sm:$0xff]
          %v1175 = vld [vmem:[#allocation2 + $0xb8] sm:$0xff]
          %v1176 = vld [vmem:[#allocation2 + $0xc0] sm:$0xff]
          %v1177 = vld [vmem:[#allocation2 + $0xc8] sm:$0xff]
          %v1178 = vld [vmem:[#allocation2 + $0xd0] sm:$0xff]
          %v1179 = vld [vmem:[#allocation2 + $0xd8] sm:$0xff]
          %v1180 = vld [vmem:[#allocation2 + $0xe0] sm:$0xff]
          %v1181 = vld [vmem:[#allocation2 + $0xe8] sm:$0xff]
          %v1182 = vld [vmem:[#allocation2 + $0xf0] sm:$0xff]
          %v1183 = vld [vmem:[#allocation2 + $0xf8] sm:$0xff]
          %v1184 = vadd.f32 %v1152, %v986
          %v1185 = vadd.f32 %v1153, %v989
          %v1186 = vadd.f32 %v1154, %v994
          %v1187 = vadd.f32 %v1155, %v997
          %v1188 = vadd.f32 %v1156, %v1002
          %v1189 = vadd.f32 %v1157, %v1005
          %v1190 = vadd.f32 %v1158, %v1010
          %v1191 = vadd.f32 %v1159, %v1013
          %v1192 = vadd.f32 %v1160, %v1018
          %v1193 = vadd.f32 %v1161, %v1021
          %v1194 = vadd.f32 %v1162, %v1026
          %v1195 = vadd.f32 %v1163, %v1029
          %v1196 = vadd.f32 %v1164, %v1034
          %v1197 = vadd.f32 %v1165, %v1037
          %v1198 = vadd.f32 %v1166, %v1042
          %v1199 = vadd.f32 %v1167, %v1045
          %v1200 = vadd.f32 %v1168, %v1050
          %v1201 = vadd.f32 %v1169, %v1053
          %v1202 = vadd.f32 %v1170, %v1058
          %v1203 = vadd.f32 %v1171, %v1061
          %v1204 = vadd.f32 %v1172, %v1066
          %v1205 = vadd.f32 %v1173, %v1069
          %v1206 = vadd.f32 %v1174, %v1074
          %v1207 = vadd.f32 %v1175, %v1077
          %v1208 = vadd.f32 %v1176, %v1082
          %v1209 = vadd.f32 %v1177, %v1085
          %v1210 = vadd.f32 %v1178, %v1090
          %v1211 = vadd.f32 %v1179, %v1093
          %v1212 = vadd.f32 %v1180, %v1098
          %v1213 = vadd.f32 %v1181, %v1101
          %v1214 = vadd.f32 %v1182, %v1106
          %v1215 = vadd.f32 %v1183, %v1109
          %1216 = vst [vmem:[#allocation2] sm:$0xff] %v1184
          %1217 = vst [vmem:[#allocation2 + $0x8] sm:$0xff] %v1185
          %1218 = vst [vmem:[#allocation2 + $0x10] sm:$0xff] %v1186
          %1219 = vst [vmem:[#allocation2 + $0x18] sm:$0xff] %v1187
          %1220 = vst [vmem:[#allocation2 + $0x20] sm:$0xff] %v1188
          %1221 = vst [vmem:[#allocation2 + $0x28] sm:$0xff] %v1189
          %1222 = vst [vmem:[#allocation2 + $0x30] sm:$0xff] %v1190
          %1223 = vst [vmem:[#allocation2 + $0x38] sm:$0xff] %v1191
          %1224 = vst [vmem:[#allocation2 + $0x40] sm:$0xff] %v1192
          %1225 = vst [vmem:[#allocation2 + $0x48] sm:$0xff] %v1193
          %1226 = vst [vmem:[#allocation2 + $0x50] sm:$0xff] %v1194
          %1227 = vst [vmem:[#allocation2 + $0x58] sm:$0xff] %v1195
          %1228 = vst [vmem:[#allocation2 + $0x60] sm:$0xff] %v1196
          %1229 = vst [vmem:[#allocation2 + $0x68] sm:$0xff] %v1197
          %1230 = vst [vmem:[#allocation2 + $0x70] sm:$0xff] %v1198
          %1231 = vst [vmem:[#allocation2 + $0x78] sm:$0xff] %v1199
          %1232 = vst [vmem:[#allocation2 + $0x80] sm:$0xff] %v1200
          %1233 = vst [vmem:[#allocation2 + $0x88] sm:$0xff] %v1201
          %1234 = vst [vmem:[#allocation2 + $0x90] sm:$0xff] %v1202
          %1235 = vst [vmem:[#allocation2 + $0x98] sm:$0xff] %v1203
          %1236 = vst [vmem:[#allocation2 + $0xa0] sm:$0xff] %v1204
          %1237 = vst [vmem:[#allocation2 + $0xa8] sm:$0xff] %v1205
          %1238 = vst [vmem:[#allocation2 + $0xb0] sm:$0xff] %v1206
          %1239 = vst [vmem:[#allocation2 + $0xb8] sm:$0xff] %v1207
          %1240 = vst [vmem:[#allocation2 + $0xc0] sm:$0xff] %v1208
          %1241 = vst [vmem:[#allocation2 + $0xc8] sm:$0xff] %v1209
          %1242 = vst [vmem:[#allocation2 + $0xd0] sm:$0xff] %v1210
          %1243 = vst [vmem:[#allocation2 + $0xd8] sm:$0xff] %v1211
          %1244 = vst [vmem:[#allocation2 + $0xe0] sm:$0xff] %v1212
          %1245 = vst [vmem:[#allocation2 + $0xe8] sm:$0xff] %v1213
          %1246 = vst [vmem:[#allocation2 + $0xf0] sm:$0xff] %v1214
          %1247 = vst [vmem:[#allocation2 + $0xf8] sm:$0xff] %v1215
        $region68: #{tpu_custom_call.1} parent=47 // pred_fallthru
          _
        // Predicated region
        $region69: #{tpu_custom_call.1} parent=47 // pred_check
          %p1248 = pneg %p1112
        $region70: #{tpu_custom_call.1} parent=47 // pred_check_branch
          %1250 = sbr.rel (%p1248) target = $region72
        $region71: #{tpu_custom_call.1} parent=47 // pred_region
          %v1251 = vld [vmem:[#allocation2] sm:$0xff]
          %v1252 = vld [vmem:[#allocation2 + $0x8] sm:$0xff]
          %v1253 = vld [vmem:[#allocation2 + $0x10] sm:$0xff]
          %v1254 = vld [vmem:[#allocation2 + $0x18] sm:$0xff]
          %v1255 = vld [vmem:[#allocation2 + $0x20] sm:$0xff]
          %v1256 = vld [vmem:[#allocation2 + $0x28] sm:$0xff]
          %v1257 = vld [vmem:[#allocation2 + $0x30] sm:$0xff]
          %v1258 = vld [vmem:[#allocation2 + $0x38] sm:$0xff]
          %v1259 = vld [vmem:[#allocation2 + $0x40] sm:$0xff]
          %v1260 = vld [vmem:[#allocation2 + $0x48] sm:$0xff]
          %v1261 = vld [vmem:[#allocation2 + $0x50] sm:$0xff]
          %v1262 = vld [vmem:[#allocation2 + $0x58] sm:$0xff]
          %v1263 = vld [vmem:[#allocation2 + $0x60] sm:$0xff]
          %v1264 = vld [vmem:[#allocation2 + $0x68] sm:$0xff]
          %v1265 = vld [vmem:[#allocation2 + $0x70] sm:$0xff]
          %v1266 = vld [vmem:[#allocation2 + $0x78] sm:$0xff]
          %v1267 = vld [vmem:[#allocation2 + $0x80] sm:$0xff]
          %v1268 = vld [vmem:[#allocation2 + $0x88] sm:$0xff]
          %v1269 = vld [vmem:[#allocation2 + $0x90] sm:$0xff]
          %v1270 = vld [vmem:[#allocation2 + $0x98] sm:$0xff]
          %v1271 = vld [vmem:[#allocation2 + $0xa0] sm:$0xff]
          %v1272 = vld [vmem:[#allocation2 + $0xa8] sm:$0xff]
          %v1273 = vld [vmem:[#allocation2 + $0xb0] sm:$0xff]
          %v1274 = vld [vmem:[#allocation2 + $0xb8] sm:$0xff]
          %v1275 = vld [vmem:[#allocation2 + $0xc0] sm:$0xff]
          %v1276 = vld [vmem:[#allocation2 + $0xc8] sm:$0xff]
          %v1277 = vld [vmem:[#allocation2 + $0xd0] sm:$0xff]
          %v1278 = vld [vmem:[#allocation2 + $0xd8] sm:$0xff]
          %v1279 = vld [vmem:[#allocation2 + $0xe0] sm:$0xff]
          %v1280 = vld [vmem:[#allocation2 + $0xe8] sm:$0xff]
          %v1281 = vld [vmem:[#allocation2 + $0xf0] sm:$0xff]
          %v1282 = vld [vmem:[#allocation2 + $0xf8] sm:$0xff]
          %v1283 = vld [vmem:[%s4] sm:$0x1]
          %v1285 = vlaneseq
          %v1286 = vshrl.u32 %v1285, 7
          %v1287 = vsub.s32 0, %v1286
          %v1288 = vrot.slane %v1283, %v1287
          %v1290 = vadd.f32 %v1251, %v1288
          %v1291 = vadd.f32 %v1252, %v1288
          %v1292 = vadd.f32 %v1253, %v1288
          %v1293 = vadd.f32 %v1254, %v1288
          %v1294 = vadd.f32 %v1255, %v1288
          %v1295 = vadd.f32 %v1256, %v1288
          %v1296 = vadd.f32 %v1257, %v1288
          %v1297 = vadd.f32 %v1258, %v1288
          %v1298 = vadd.f32 %v1259, %v1288
          %v1299 = vadd.f32 %v1260, %v1288
          %v1300 = vadd.f32 %v1261, %v1288
          %v1301 = vadd.f32 %v1262, %v1288
          %v1302 = vadd.f32 %v1263, %v1288
          %v1303 = vadd.f32 %v1264, %v1288
          %v1304 = vadd.f32 %v1265, %v1288
          %v1305 = vadd.f32 %v1266, %v1288
          %v1306 = vadd.f32 %v1267, %v1288
          %v1307 = vadd.f32 %v1268, %v1288
          %v1308 = vadd.f32 %v1269, %v1288
          %v1309 = vadd.f32 %v1270, %v1288
          %v1310 = vadd.f32 %v1271, %v1288
          %v1311 = vadd.f32 %v1272, %v1288
          %v1312 = vadd.f32 %v1273, %v1288
          %v1313 = vadd.f32 %v1274, %v1288
          %v1314 = vadd.f32 %v1275, %v1288
          %v1315 = vadd.f32 %v1276, %v1288
          %v1316 = vadd.f32 %v1277, %v1288
          %v1317 = vadd.f32 %v1278, %v1288
          %v1318 = vadd.f32 %v1279, %v1288
          %v1319 = vadd.f32 %v1280, %v1288
          %v1320 = vadd.f32 %v1281, %v1288
          %v1321 = vadd.f32 %v1282, %v1288
          %v1322 = vld [vmem:[%s325] sm:$0xff]
          %v1323 = vld [vmem:[%s325 + $0x8] sm:$0xff]
          %v1324 = vld [vmem:[%s325 + $0x10] sm:$0xff]
          %v1325 = vld [vmem:[%s325 + $0x18] sm:$0xff]
          %v1326 = vld [vmem:[%s325 + $0x20] sm:$0xff]
          %v1327 = vld [vmem:[%s325 + $0x28] sm:$0xff]
          %v1328 = vld [vmem:[%s325 + $0x30] sm:$0xff]
          %v1329 = vld [vmem:[%s325 + $0x38] sm:$0xff]
          %v1330 = vld [vmem:[%s325 + $0x40] sm:$0xff]
          %v1331 = vld [vmem:[%s325 + $0x48] sm:$0xff]
          %v1332 = vld [vmem:[%s325 + $0x50] sm:$0xff]
          %v1333 = vld [vmem:[%s325 + $0x58] sm:$0xff]
          %v1334 = vld [vmem:[%s325 + $0x60] sm:$0xff]
          %v1335 = vld [vmem:[%s325 + $0x68] sm:$0xff]
          %v1336 = vld [vmem:[%s325 + $0x70] sm:$0xff]
          %v1337 = vld [vmem:[%s325 + $0x78] sm:$0xff]
          %v1338 = vld [vmem:[%s325 + $0x80] sm:$0xff]
          %v1339 = vld [vmem:[%s325 + $0x88] sm:$0xff]
          %v1340 = vld [vmem:[%s325 + $0x90] sm:$0xff]
          %v1341 = vld [vmem:[%s325 + $0x98] sm:$0xff]
          %v1342 = vld [vmem:[%s325 + $0xa0] sm:$0xff]
          %v1343 = vld [vmem:[%s325 + $0xa8] sm:$0xff]
          %v1344 = vld [vmem:[%s325 + $0xb0] sm:$0xff]
          %v1345 = vld [vmem:[%s325 + $0xb8] sm:$0xff]
          %v1346 = vld [vmem:[%s325 + $0xc0] sm:$0xff]
          %v1347 = vld [vmem:[%s325 + $0xc8] sm:$0xff]
          %v1348 = vld [vmem:[%s325 + $0xd0] sm:$0xff]
          %v1349 = vld [vmem:[%s325 + $0xd8] sm:$0xff]
          %v1350 = vld [vmem:[%s325 + $0xe0] sm:$0xff]
          %v1351 = vld [vmem:[%s325 + $0xe8] sm:$0xff]
          %v1352 = vld [vmem:[%s325 + $0xf0] sm:$0xff]
          %v1353 = vld [vmem:[%s325 + $0xf8] sm:$0xff]
          %v1354 = vadd.f32 %v1290, %v1322
          %v1355 = vadd.f32 %v1291, %v1323
          %v1356 = vadd.f32 %v1292, %v1324
          %v1357 = vadd.f32 %v1293, %v1325
          %v1358 = vadd.f32 %v1294, %v1326
          %v1359 = vadd.f32 %v1295, %v1327
          %v1360 = vadd.f32 %v1296, %v1328
          %v1361 = vadd.f32 %v1297, %v1329
          %v1362 = vadd.f32 %v1298, %v1330
          %v1363 = vadd.f32 %v1299, %v1331
          %v1364 = vadd.f32 %v1300, %v1332
          %v1365 = vadd.f32 %v1301, %v1333
          %v1366 = vadd.f32 %v1302, %v1334
          %v1367 = vadd.f32 %v1303, %v1335
          %v1368 = vadd.f32 %v1304, %v1336
          %v1369 = vadd.f32 %v1305, %v1337
          %v1370 = vadd.f32 %v1306, %v1338
          %v1371 = vadd.f32 %v1307, %v1339
          %v1372 = vadd.f32 %v1308, %v1340
          %v1373 = vadd.f32 %v1309, %v1341
          %v1374 = vadd.f32 %v1310, %v1342
          %v1375 = vadd.f32 %v1311, %v1343
          %v1376 = vadd.f32 %v1312, %v1344
          %v1377 = vadd.f32 %v1313, %v1345
          %v1378 = vadd.f32 %v1314, %v1346
          %v1379 = vadd.f32 %v1315, %v1347
          %v1380 = vadd.f32 %v1316, %v1348
          %v1381 = vadd.f32 %v1317, %v1349
          %v1382 = vadd.f32 %v1318, %v1350
          %v1383 = vadd.f32 %v1319, %v1351
          %v1384 = vadd.f32 %v1320, %v1352
          %v1385 = vadd.f32 %v1321, %v1353
          %1386 = vadd.xlane.f32.xlu0 %v1354
          %v1387 = vpop.xlane.xlu0 %1386
          %1388 = vadd.xlane.f32.xlu0 %v1355
          %v1389 = vpop.xlane.xlu0 %1388
          %1390 = vadd.xlane.f32.xlu0 %v1356
          %v1391 = vpop.xlane.xlu0 %1390
          %1392 = vadd.xlane.f32.xlu0 %v1357
          %v1393 = vpop.xlane.xlu0 %1392
          %1394 = vadd.xlane.f32.xlu0 %v1358
          %v1395 = vpop.xlane.xlu0 %1394
          %1396 = vadd.xlane.f32.xlu0 %v1359
          %v1397 = vpop.xlane.xlu0 %1396
          %1398 = vadd.xlane.f32.xlu0 %v1360
          %v1399 = vpop.xlane.xlu0 %1398
          %1400 = vadd.xlane.f32.xlu0 %v1361
          %v1401 = vpop.xlane.xlu0 %1400
          %1402 = vadd.xlane.f32.xlu0 %v1362
          %v1403 = vpop.xlane.xlu0 %1402
          %1404 = vadd.xlane.f32.xlu0 %v1363
          %v1405 = vpop.xlane.xlu0 %1404
          %1406 = vadd.xlane.f32.xlu0 %v1364
          %v1407 = vpop.xlane.xlu0 %1406
          %1408 = vadd.xlane.f32.xlu0 %v1365
          %v1409 = vpop.xlane.xlu0 %1408
          %1410 = vadd.xlane.f32.xlu0 %v1366
          %v1411 = vpop.xlane.xlu0 %1410
          %1412 = vadd.xlane.f32.xlu0 %v1367
          %v1413 = vpop.xlane.xlu0 %1412
          %1414 = vadd.xlane.f32.xlu0 %v1368
          %v1415 = vpop.xlane.xlu0 %1414
          %1416 = vadd.xlane.f32.xlu0 %v1369
          %v1417 = vpop.xlane.xlu0 %1416
          %1418 = vadd.xlane.f32.xlu0 %v1370
          %v1419 = vpop.xlane.xlu0 %1418
          %1420 = vadd.xlane.f32.xlu0 %v1371
          %v1421 = vpop.xlane.xlu0 %1420
          %1422 = vadd.xlane.f32.xlu0 %v1372
          %v1423 = vpop.xlane.xlu0 %1422
          %1424 = vadd.xlane.f32.xlu0 %v1373
          %v1425 = vpop.xlane.xlu0 %1424
          %1426 = vadd.xlane.f32.xlu0 %v1374
          %v1427 = vpop.xlane.xlu0 %1426
          %1428 = vadd.xlane.f32.xlu0 %v1375
          %v1429 = vpop.xlane.xlu0 %1428
          %1430 = vadd.xlane.f32.xlu0 %v1376
          %v1431 = vpop.xlane.xlu0 %1430
          %1432 = vadd.xlane.f32.xlu0 %v1377
          %v1433 = vpop.xlane.xlu0 %1432
          %1434 = vadd.xlane.f32.xlu0 %v1378
          %v1435 = vpop.xlane.xlu0 %1434
          %1436 = vadd.xlane.f32.xlu0 %v1379
          %v1437 = vpop.xlane.xlu0 %1436
          %1438 = vadd.xlane.f32.xlu0 %v1380
          %v1439 = vpop.xlane.xlu0 %1438
          %1440 = vadd.xlane.f32.xlu0 %v1381
          %v1441 = vpop.xlane.xlu0 %1440
          %1442 = vadd.xlane.f32.xlu0 %v1382
          %v1443 = vpop.xlane.xlu0 %1442
          %1444 = vadd.xlane.f32.xlu0 %v1383
          %v1445 = vpop.xlane.xlu0 %1444
          %1446 = vadd.xlane.f32.xlu0 %v1384
          %v1447 = vpop.xlane.xlu0 %1446
          %1448 = vadd.xlane.f32.xlu0 %v1385
          %v1449 = vpop.xlane.xlu0 %1448
          %v1450 = vmul.f32 %v1354, %v1354
          %v1451 = vmul.f32 %v1355, %v1355
          %v1452 = vmul.f32 %v1356, %v1356
          %v1453 = vmul.f32 %v1357, %v1357
          %v1454 = vmul.f32 %v1358, %v1358
          %v1455 = vmul.f32 %v1359, %v1359
          %v1456 = vmul.f32 %v1360, %v1360
          %v1457 = vmul.f32 %v1361, %v1361
          %v1458 = vmul.f32 %v1362, %v1362
          %v1459 = vmul.f32 %v1363, %v1363
          %v1460 = vmul.f32 %v1364, %v1364
          %v1461 = vmul.f32 %v1365, %v1365
          %v1462 = vmul.f32 %v1366, %v1366
          %v1463 = vmul.f32 %v1367, %v1367
          %v1464 = vmul.f32 %v1368, %v1368
          %v1465 = vmul.f32 %v1369, %v1369
          %v1466 = vmul.f32 %v1370, %v1370
          %v1467 = vmul.f32 %v1371, %v1371
          %v1468 = vmul.f32 %v1372, %v1372
          %v1469 = vmul.f32 %v1373, %v1373
          %v1470 = vmul.f32 %v1374, %v1374
          %v1471 = vmul.f32 %v1375, %v1375
          %v1472 = vmul.f32 %v1376, %v1376
          %v1473 = vmul.f32 %v1377, %v1377
          %v1474 = vmul.f32 %v1378, %v1378
          %v1475 = vmul.f32 %v1379, %v1379
          %v1476 = vmul.f32 %v1380, %v1380
          %v1477 = vmul.f32 %v1381, %v1381
          %v1478 = vmul.f32 %v1382, %v1382
          %v1479 = vmul.f32 %v1383, %v1383
          %v1480 = vmul.f32 %v1384, %v1384
          %v1481 = vmul.f32 %v1385, %v1385
          %1482 = vadd.xlane.f32.xlu0 %v1450
          %v1483 = vpop.xlane.xlu0 %1482
          %1484 = vadd.xlane.f32.xlu0 %v1451
          %v1485 = vpop.xlane.xlu0 %1484
          %1486 = vadd.xlane.f32.xlu0 %v1452
          %v1487 = vpop.xlane.xlu0 %1486
          %1488 = vadd.xlane.f32.xlu0 %v1453
          %v1489 = vpop.xlane.xlu0 %1488
          %1490 = vadd.xlane.f32.xlu0 %v1454
          %v1491 = vpop.xlane.xlu0 %1490
          %1492 = vadd.xlane.f32.xlu0 %v1455
          %v1493 = vpop.xlane.xlu0 %1492
          %1494 = vadd.xlane.f32.xlu0 %v1456
          %v1495 = vpop.xlane.xlu0 %1494
          %1496 = vadd.xlane.f32.xlu0 %v1457
          %v1497 = vpop.xlane.xlu0 %1496
          %1498 = vadd.xlane.f32.xlu0 %v1458
          %v1499 = vpop.xlane.xlu0 %1498
          %1500 = vadd.xlane.f32.xlu0 %v1459
          %v1501 = vpop.xlane.xlu0 %1500
          %1502 = vadd.xlane.f32.xlu0 %v1460
          %v1503 = vpop.xlane.xlu0 %1502
          %1504 = vadd.xlane.f32.xlu0 %v1461
          %v1505 = vpop.xlane.xlu0 %1504
          %1506 = vadd.xlane.f32.xlu0 %v1462
          %v1507 = vpop.xlane.xlu0 %1506
          %1508 = vadd.xlane.f32.xlu0 %v1463
          %v1509 = vpop.xlane.xlu0 %1508
          %1510 = vadd.xlane.f32.xlu0 %v1464
          %v1511 = vpop.xlane.xlu0 %1510
          %1512 = vadd.xlane.f32.xlu0 %v1465
          %v1513 = vpop.xlane.xlu0 %1512
          %1514 = vadd.xlane.f32.xlu0 %v1466
          %v1515 = vpop.xlane.xlu0 %1514
          %1516 = vadd.xlane.f32.xlu0 %v1467
          %v1517 = vpop.xlane.xlu0 %1516
          %1518 = vadd.xlane.f32.xlu0 %v1468
          %v1519 = vpop.xlane.xlu0 %1518
          %1520 = vadd.xlane.f32.xlu0 %v1469
          %v1521 = vpop.xlane.xlu0 %1520
          %1522 = vadd.xlane.f32.xlu0 %v1470
          %v1523 = vpop.xlane.xlu0 %1522
          %1524 = vadd.xlane.f32.xlu0 %v1471
          %v1525 = vpop.xlane.xlu0 %1524
          %1526 = vadd.xlane.f32.xlu0 %v1472
          %v1527 = vpop.xlane.xlu0 %1526
          %1528 = vadd.xlane.f32.xlu0 %v1473
          %v1529 = vpop.xlane.xlu0 %1528
          %1530 = vadd.xlane.f32.xlu0 %v1474
          %v1531 = vpop.xlane.xlu0 %1530
          %1532 = vadd.xlane.f32.xlu0 %v1475
          %v1533 = vpop.xlane.xlu0 %1532
          %1534 = vadd.xlane.f32.xlu0 %v1476
          %v1535 = vpop.xlane.xlu0 %1534
          %1536 = vadd.xlane.f32.xlu0 %v1477
          %v1537 = vpop.xlane.xlu0 %1536
          %1538 = vadd.xlane.f32.xlu0 %v1478
          %v1539 = vpop.xlane.xlu0 %1538
          %1540 = vadd.xlane.f32.xlu0 %v1479
          %v1541 = vpop.xlane.xlu0 %1540
          %1542 = vadd.xlane.f32.xlu0 %v1480
          %v1543 = vpop.xlane.xlu0 %1542
          %1544 = vadd.xlane.f32.xlu0 %v1481
          %v1545 = vpop.xlane.xlu0 %1544
          %v1546 = vmul.f32 %v1387, 0.0078125
          %v1547 = vmul.f32 %v1389, 0.0078125
          %v1548 = vmul.f32 %v1391, 0.0078125
          %v1549 = vmul.f32 %v1393, 0.0078125
          %v1550 = vmul.f32 %v1395, 0.0078125
          %v1551 = vmul.f32 %v1397, 0.0078125
          %v1552 = vmul.f32 %v1399, 0.0078125
          %v1553 = vmul.f32 %v1401, 0.0078125
          %v1554 = vmul.f32 %v1403, 0.0078125
          %v1555 = vmul.f32 %v1405, 0.0078125
          %v1556 = vmul.f32 %v1407, 0.0078125
          %v1557 = vmul.f32 %v1409, 0.0078125
          %v1558 = vmul.f32 %v1411, 0.0078125
          %v1559 = vmul.f32 %v1413, 0.0078125
          %v1560 = vmul.f32 %v1415, 0.0078125
          %v1561 = vmul.f32 %v1417, 0.0078125
          %v1562 = vmul.f32 %v1419, 0.0078125
          %v1563 = vmul.f32 %v1421, 0.0078125
          %v1564 = vmul.f32 %v1423, 0.0078125
          %v1565 = vmul.f32 %v1425, 0.0078125
          %v1566 = vmul.f32 %v1427, 0.0078125
          %v1567 = vmul.f32 %v1429, 0.0078125
          %v1568 = vmul.f32 %v1431, 0.0078125
          %v1569 = vmul.f32 %v1433, 0.0078125
          %v1570 = vmul.f32 %v1435, 0.0078125
          %v1571 = vmul.f32 %v1437, 0.0078125
          %v1572 = vmul.f32 %v1439, 0.0078125
          %v1573 = vmul.f32 %v1441, 0.0078125
          %v1574 = vmul.f32 %v1443, 0.0078125
          %v1575 = vmul.f32 %v1445, 0.0078125
          %v1576 = vmul.f32 %v1447, 0.0078125
          %v1577 = vmul.f32 %v1449, 0.0078125
          %v1578 = vmul.f32 %v1483, 0.0078125
          %v1579 = vmul.f32 %v1485, 0.0078125
          %v1580 = vmul.f32 %v1487, 0.0078125
          %v1581 = vmul.f32 %v1489, 0.0078125
          %v1582 = vmul.f32 %v1491, 0.0078125
          %v1583 = vmul.f32 %v1493, 0.0078125
          %v1584 = vmul.f32 %v1495, 0.0078125
          %v1585 = vmul.f32 %v1497, 0.0078125
          %v1586 = vmul.f32 %v1499, 0.0078125
          %v1587 = vmul.f32 %v1501, 0.0078125
          %v1588 = vmul.f32 %v1503, 0.0078125
          %v1589 = vmul.f32 %v1505, 0.0078125
          %v1590 = vmul.f32 %v1507, 0.0078125
          %v1591 = vmul.f32 %v1509, 0.0078125
          %v1592 = vmul.f32 %v1511, 0.0078125
          %v1593 = vmul.f32 %v1513, 0.0078125
          %v1594 = vmul.f32 %v1515, 0.0078125
          %v1595 = vmul.f32 %v1517, 0.0078125
          %v1596 = vmul.f32 %v1519, 0.0078125
          %v1597 = vmul.f32 %v1521, 0.0078125
          %v1598 = vmul.f32 %v1523, 0.0078125
          %v1599 = vmul.f32 %v1525, 0.0078125
          %v1600 = vmul.f32 %v1527, 0.0078125
          %v1601 = vmul.f32 %v1529, 0.0078125
          %v1602 = vmul.f32 %v1531, 0.0078125
          %v1603 = vmul.f32 %v1533, 0.0078125
          %v1604 = vmul.f32 %v1535, 0.0078125
          %v1605 = vmul.f32 %v1537, 0.0078125
          %v1606 = vmul.f32 %v1539, 0.0078125
          %v1607 = vmul.f32 %v1541, 0.0078125
          %v1608 = vmul.f32 %v1543, 0.0078125
          %v1609 = vmul.f32 %v1545, 0.0078125
          %v1610 = vmul.f32 %v1546, %v1546
          %v1611 = vmul.f32 %v1547, %v1547
          %v1612 = vmul.f32 %v1548, %v1548
          %v1613 = vmul.f32 %v1549, %v1549
          %v1614 = vmul.f32 %v1550, %v1550
          %v1615 = vmul.f32 %v1551, %v1551
          %v1616 = vmul.f32 %v1552, %v1552
          %v1617 = vmul.f32 %v1553, %v1553
          %v1618 = vmul.f32 %v1554, %v1554
          %v1619 = vmul.f32 %v1555, %v1555
          %v1620 = vmul.f32 %v1556, %v1556
          %v1621 = vmul.f32 %v1557, %v1557
          %v1622 = vmul.f32 %v1558, %v1558
          %v1623 = vmul.f32 %v1559, %v1559
          %v1624 = vmul.f32 %v1560, %v1560
          %v1625 = vmul.f32 %v1561, %v1561
          %v1626 = vmul.f32 %v1562, %v1562
          %v1627 = vmul.f32 %v1563, %v1563
          %v1628 = vmul.f32 %v1564, %v1564
          %v1629 = vmul.f32 %v1565, %v1565
          %v1630 = vmul.f32 %v1566, %v1566
          %v1631 = vmul.f32 %v1567, %v1567
          %v1632 = vmul.f32 %v1568, %v1568
          %v1633 = vmul.f32 %v1569, %v1569
          %v1634 = vmul.f32 %v1570, %v1570
          %v1635 = vmul.f32 %v1571, %v1571
          %v1636 = vmul.f32 %v1572, %v1572
          %v1637 = vmul.f32 %v1573, %v1573
          %v1638 = vmul.f32 %v1574, %v1574
          %v1639 = vmul.f32 %v1575, %v1575
          %v1640 = vmul.f32 %v1576, %v1576
          %v1641 = vmul.f32 %v1577, %v1577
          %v1642 = vsub.f32 %v1578, %v1610
          %v1643 = vsub.f32 %v1579, %v1611
          %v1644 = vsub.f32 %v1580, %v1612
          %v1645 = vsub.f32 %v1581, %v1613
          %v1646 = vsub.f32 %v1582, %v1614
          %v1647 = vsub.f32 %v1583, %v1615
          %v1648 = vsub.f32 %v1584, %v1616
          %v1649 = vsub.f32 %v1585, %v1617
          %v1650 = vsub.f32 %v1586, %v1618
          %v1651 = vsub.f32 %v1587, %v1619
          %v1652 = vsub.f32 %v1588, %v1620
          %v1653 = vsub.f32 %v1589, %v1621
          %v1654 = vsub.f32 %v1590, %v1622
          %v1655 = vsub.f32 %v1591, %v1623
          %v1656 = vsub.f32 %v1592, %v1624
          %v1657 = vsub.f32 %v1593, %v1625
          %v1658 = vsub.f32 %v1594, %v1626
          %v1659 = vsub.f32 %v1595, %v1627
          %v1660 = vsub.f32 %v1596, %v1628
          %v1661 = vsub.f32 %v1597, %v1629
          %v1662 = vsub.f32 %v1598, %v1630
          %v1663 = vsub.f32 %v1599, %v1631
          %v1664 = vsub.f32 %v1600, %v1632
          %v1665 = vsub.f32 %v1601, %v1633
          %v1666 = vsub.f32 %v1602, %v1634
          %v1667 = vsub.f32 %v1603, %v1635
          %v1668 = vsub.f32 %v1604, %v1636
          %v1669 = vsub.f32 %v1605, %v1637
          %v1670 = vsub.f32 %v1606, %v1638
          %v1671 = vsub.f32 %v1607, %v1639
          %v1672 = vsub.f32 %v1608, %v1640
          %v1673 = vsub.f32 %v1609, %v1641
          %v1674 = vsub.f32 %v1354, %v1546
          %v1675 = vsub.f32 %v1355, %v1547
          %v1676 = vsub.f32 %v1356, %v1548
          %v1677 = vsub.f32 %v1357, %v1549
          %v1678 = vsub.f32 %v1358, %v1550
          %v1679 = vsub.f32 %v1359, %v1551
          %v1680 = vsub.f32 %v1360, %v1552
          %v1681 = vsub.f32 %v1361, %v1553
          %v1682 = vsub.f32 %v1362, %v1554
          %v1683 = vsub.f32 %v1363, %v1555
          %v1684 = vsub.f32 %v1364, %v1556
          %v1685 = vsub.f32 %v1365, %v1557
          %v1686 = vsub.f32 %v1366, %v1558
          %v1687 = vsub.f32 %v1367, %v1559
          %v1688 = vsub.f32 %v1368, %v1560
          %v1689 = vsub.f32 %v1369, %v1561
          %v1690 = vsub.f32 %v1370, %v1562
          %v1691 = vsub.f32 %v1371, %v1563
          %v1692 = vsub.f32 %v1372, %v1564
          %v1693 = vsub.f32 %v1373, %v1565
          %v1694 = vsub.f32 %v1374, %v1566
          %v1695 = vsub.f32 %v1375, %v1567
          %v1696 = vsub.f32 %v1376, %v1568
          %v1697 = vsub.f32 %v1377, %v1569
          %v1698 = vsub.f32 %v1378, %v1570
          %v1699 = vsub.f32 %v1379, %v1571
          %v1700 = vsub.f32 %v1380, %v1572
          %v1701 = vsub.f32 %v1381, %v1573
          %v1702 = vsub.f32 %v1382, %v1574
          %v1703 = vsub.f32 %v1383, %v1575
          %v1704 = vsub.f32 %v1384, %v1576
          %v1705 = vsub.f32 %v1385, %v1577
          %v1706 = vadd.f32 %v1642, 1e-06
          %v1707 = vadd.f32 %v1643, 1e-06
          %v1708 = vadd.f32 %v1644, 1e-06
          %v1709 = vadd.f32 %v1645, 1e-06
          %v1710 = vadd.f32 %v1646, 1e-06
          %v1711 = vadd.f32 %v1647, 1e-06
          %v1712 = vadd.f32 %v1648, 1e-06
          %v1713 = vadd.f32 %v1649, 1e-06
          %v1714 = vadd.f32 %v1650, 1e-06
          %v1715 = vadd.f32 %v1651, 1e-06
          %v1716 = vadd.f32 %v1652, 1e-06
          %v1717 = vadd.f32 %v1653, 1e-06
          %v1718 = vadd.f32 %v1654, 1e-06
          %v1719 = vadd.f32 %v1655, 1e-06
          %v1720 = vadd.f32 %v1656, 1e-06
          %v1721 = vadd.f32 %v1657, 1e-06
          %v1722 = vadd.f32 %v1658, 1e-06
          %v1723 = vadd.f32 %v1659, 1e-06
          %v1724 = vadd.f32 %v1660, 1e-06
          %v1725 = vadd.f32 %v1661, 1e-06
          %v1726 = vadd.f32 %v1662, 1e-06
          %v1727 = vadd.f32 %v1663, 1e-06
          %v1728 = vadd.f32 %v1664, 1e-06
          %v1729 = vadd.f32 %v1665, 1e-06
          %v1730 = vadd.f32 %v1666, 1e-06
          %v1731 = vadd.f32 %v1667, 1e-06
          %v1732 = vadd.f32 %v1668, 1e-06
          %v1733 = vadd.f32 %v1669, 1e-06
          %v1734 = vadd.f32 %v1670, 1e-06
          %v1735 = vadd.f32 %v1671, 1e-06
          %v1736 = vadd.f32 %v1672, 1e-06
          %v1737 = vadd.f32 %v1673, 1e-06
          %v1738 = vrsqrt.pop %v1706
          %v1739 = vrsqrt.pop %v1707
          %v1740 = vrsqrt.pop %v1708
          %v1741 = vrsqrt.pop %v1709
          %v1742 = vrsqrt.pop %v1710
          %v1743 = vrsqrt.pop %v1711
          %v1744 = vrsqrt.pop %v1712
          %v1745 = vrsqrt.pop %v1713
          %v1746 = vrsqrt.pop %v1714
          %v1747 = vrsqrt.pop %v1715
          %v1748 = vrsqrt.pop %v1716
          %v1749 = vrsqrt.pop %v1717
          %v1750 = vrsqrt.pop %v1718
          %v1751 = vrsqrt.pop %v1719
          %v1752 = vrsqrt.pop %v1720
          %v1753 = vrsqrt.pop %v1721
          %v1754 = vrsqrt.pop %v1722
          %v1755 = vrsqrt.pop %v1723
          %v1756 = vrsqrt.pop %v1724
          %v1757 = vrsqrt.pop %v1725
          %v1758 = vrsqrt.pop %v1726
          %v1759 = vrsqrt.pop %v1727
          %v1760 = vrsqrt.pop %v1728
          %v1761 = vrsqrt.pop %v1729
          %v1762 = vrsqrt.pop %v1730
          %v1763 = vrsqrt.pop %v1731
          %v1764 = vrsqrt.pop %v1732
          %v1765 = vrsqrt.pop %v1733
          %v1766 = vrsqrt.pop %v1734
          %v1767 = vrsqrt.pop %v1735
          %v1768 = vrsqrt.pop %v1736
          %v1769 = vrsqrt.pop %v1737
          %v1770 = vmul.f32 %v1674, %v1738
          %v1771 = vmul.f32 %v1675, %v1739
          %v1772 = vmul.f32 %v1676, %v1740
          %v1773 = vmul.f32 %v1677, %v1741
          %v1774 = vmul.f32 %v1678, %v1742
          %v1775 = vmul.f32 %v1679, %v1743
          %v1776 = vmul.f32 %v1680, %v1744
          %v1777 = vmul.f32 %v1681, %v1745
          %v1778 = vmul.f32 %v1682, %v1746
          %v1779 = vmul.f32 %v1683, %v1747
          %v1780 = vmul.f32 %v1684, %v1748
          %v1781 = vmul.f32 %v1685, %v1749
          %v1782 = vmul.f32 %v1686, %v1750
          %v1783 = vmul.f32 %v1687, %v1751
          %v1784 = vmul.f32 %v1688, %v1752
          %v1785 = vmul.f32 %v1689, %v1753
          %v1786 = vmul.f32 %v1690, %v1754
          %v1787 = vmul.f32 %v1691, %v1755
          %v1788 = vmul.f32 %v1692, %v1756
          %v1789 = vmul.f32 %v1693, %v1757
          %v1790 = vmul.f32 %v1694, %v1758
          %v1791 = vmul.f32 %v1695, %v1759
          %v1792 = vmul.f32 %v1696, %v1760
          %v1793 = vmul.f32 %v1697, %v1761
          %v1794 = vmul.f32 %v1698, %v1762
          %v1795 = vmul.f32 %v1699, %v1763
          %v1796 = vmul.f32 %v1700, %v1764
          %v1797 = vmul.f32 %v1701, %v1765
          %v1798 = vmul.f32 %v1702, %v1766
          %v1799 = vmul.f32 %v1703, %v1767
          %v1800 = vmul.f32 %v1704, %v1768
          %v1801 = vmul.f32 %v1705, %v1769
          %v1802 = vld [vmem:[%s5] sm:$0x1]
          %v1804 = vlaneseq
          %v1805 = vshrl.u32 %v1804, 7
          %v1806 = vsub.s32 0, %v1805
          %v1807 = vrot.slane %v1802, %v1806
          %v1809 = vmul.f32 %v1770, %v1807
          %v1810 = vmul.f32 %v1771, %v1807
          %v1811 = vmul.f32 %v1772, %v1807
          %v1812 = vmul.f32 %v1773, %v1807
          %v1813 = vmul.f32 %v1774, %v1807
          %v1814 = vmul.f32 %v1775, %v1807
          %v1815 = vmul.f32 %v1776, %v1807
          %v1816 = vmul.f32 %v1777, %v1807
          %v1817 = vmul.f32 %v1778, %v1807
          %v1818 = vmul.f32 %v1779, %v1807
          %v1819 = vmul.f32 %v1780, %v1807
          %v1820 = vmul.f32 %v1781, %v1807
          %v1821 = vmul.f32 %v1782, %v1807
          %v1822 = vmul.f32 %v1783, %v1807
          %v1823 = vmul.f32 %v1784, %v1807
          %v1824 = vmul.f32 %v1785, %v1807
          %v1825 = vmul.f32 %v1786, %v1807
          %v1826 = vmul.f32 %v1787, %v1807
          %v1827 = vmul.f32 %v1788, %v1807
          %v1828 = vmul.f32 %v1789, %v1807
          %v1829 = vmul.f32 %v1790, %v1807
          %v1830 = vmul.f32 %v1791, %v1807
          %v1831 = vmul.f32 %v1792, %v1807
          %v1832 = vmul.f32 %v1793, %v1807
          %v1833 = vmul.f32 %v1794, %v1807
          %v1834 = vmul.f32 %v1795, %v1807
          %v1835 = vmul.f32 %v1796, %v1807
          %v1836 = vmul.f32 %v1797, %v1807
          %v1837 = vmul.f32 %v1798, %v1807
          %v1838 = vmul.f32 %v1799, %v1807
          %v1839 = vmul.f32 %v1800, %v1807
          %v1840 = vmul.f32 %v1801, %v1807
          %v1841 = vld [vmem:[%s6] sm:$0x1]
          %v1843 = vlaneseq
          %v1844 = vshrl.u32 %v1843, 7
          %v1845 = vsub.s32 0, %v1844
          %v1846 = vrot.slane %v1841, %v1845
          %v1848 = vadd.f32 %v1809, %v1846
          %v1849 = vadd.f32 %v1810, %v1846
          %v1850 = vadd.f32 %v1811, %v1846
          %v1851 = vadd.f32 %v1812, %v1846
          %v1852 = vadd.f32 %v1813, %v1846
          %v1853 = vadd.f32 %v1814, %v1846
          %v1854 = vadd.f32 %v1815, %v1846
          %v1855 = vadd.f32 %v1816, %v1846
          %v1856 = vadd.f32 %v1817, %v1846
          %v1857 = vadd.f32 %v1818, %v1846
          %v1858 = vadd.f32 %v1819, %v1846
          %v1859 = vadd.f32 %v1820, %v1846
          %v1860 = vadd.f32 %v1821, %v1846
          %v1861 = vadd.f32 %v1822, %v1846
          %v1862 = vadd.f32 %v1823, %v1846
          %v1863 = vadd.f32 %v1824, %v1846
          %v1864 = vadd.f32 %v1825, %v1846
          %v1865 = vadd.f32 %v1826, %v1846
          %v1866 = vadd.f32 %v1827, %v1846
          %v1867 = vadd.f32 %v1828, %v1846
          %v1868 = vadd.f32 %v1829, %v1846
          %v1869 = vadd.f32 %v1830, %v1846
          %v1870 = vadd.f32 %v1831, %v1846
          %v1871 = vadd.f32 %v1832, %v1846
          %v1872 = vadd.f32 %v1833, %v1846
          %v1873 = vadd.f32 %v1834, %v1846
          %v1874 = vadd.f32 %v1835, %v1846
          %v1875 = vadd.f32 %v1836, %v1846
          %v1876 = vadd.f32 %v1837, %v1846
          %v1877 = vadd.f32 %v1838, %v1846
          %v1878 = vadd.f32 %v1839, %v1846
          %v1879 = vadd.f32 %v1840, %v1846
          %1880 = vst [vmem:[%s367] sm:$0xff] %v1848
          %1881 = vst [vmem:[%s367 + $0x8] sm:$0xff] %v1849
          %1882 = vst [vmem:[%s367 + $0x10] sm:$0xff] %v1850
          %1883 = vst [vmem:[%s367 + $0x18] sm:$0xff] %v1851
          %1884 = vst [vmem:[%s367 + $0x20] sm:$0xff] %v1852
          %1885 = vst [vmem:[%s367 + $0x28] sm:$0xff] %v1853
          %1886 = vst [vmem:[%s367 + $0x30] sm:$0xff] %v1854
          %1887 = vst [vmem:[%s367 + $0x38] sm:$0xff] %v1855
          %1888 = vst [vmem:[%s367 + $0x40] sm:$0xff] %v1856
          %1889 = vst [vmem:[%s367 + $0x48] sm:$0xff] %v1857
          %1890 = vst [vmem:[%s367 + $0x50] sm:$0xff] %v1858
          %1891 = vst [vmem:[%s367 + $0x58] sm:$0xff] %v1859
          %1892 = vst [vmem:[%s367 + $0x60] sm:$0xff] %v1860
          %1893 = vst [vmem:[%s367 + $0x68] sm:$0xff] %v1861
          %1894 = vst [vmem:[%s367 + $0x70] sm:$0xff] %v1862
          %1895 = vst [vmem:[%s367 + $0x78] sm:$0xff] %v1863
          %1896 = vst [vmem:[%s367 + $0x80] sm:$0xff] %v1864
          %1897 = vst [vmem:[%s367 + $0x88] sm:$0xff] %v1865
          %1898 = vst [vmem:[%s367 + $0x90] sm:$0xff] %v1866
          %1899 = vst [vmem:[%s367 + $0x98] sm:$0xff] %v1867
          %1900 = vst [vmem:[%s367 + $0xa0] sm:$0xff] %v1868
          %1901 = vst [vmem:[%s367 + $0xa8] sm:$0xff] %v1869
          %1902 = vst [vmem:[%s367 + $0xb0] sm:$0xff] %v1870
          %1903 = vst [vmem:[%s367 + $0xb8] sm:$0xff] %v1871
          %1904 = vst [vmem:[%s367 + $0xc0] sm:$0xff] %v1872
          %1905 = vst [vmem:[%s367 + $0xc8] sm:$0xff] %v1873
          %1906 = vst [vmem:[%s367 + $0xd0] sm:$0xff] %v1874
          %1907 = vst [vmem:[%s367 + $0xd8] sm:$0xff] %v1875
          %1908 = vst [vmem:[%s367 + $0xe0] sm:$0xff] %v1876
          %1909 = vst [vmem:[%s367 + $0xe8] sm:$0xff] %v1877
          %1910 = vst [vmem:[%s367 + $0xf0] sm:$0xff] %v1878
          %1911 = vst [vmem:[%s367 + $0xf8] sm:$0xff] %v1879
        $region72: #{tpu_custom_call.1} parent=47 // pred_fallthru
          _
        %s1912 = sand.u32 %s212, 1
        %s1913 = scalar_lea.sflag [#allocation5], %s1912
        %s1914 = sand.u32 %s212, 1
        %s1915 = smul.addr %s1914, 256
        %s1916 = scalar_lea.vmem [#allocation9], %s1915
        // Predicated region
        $region73: #{tpu_custom_call.1} parent=47 // pred_check
          %p1917 = pneg %p222
        $region74: #{tpu_custom_call.1} parent=47 // pred_check_branch
          %1919 = sbr.rel (%p1917) target = $region76
        $region75: #{tpu_custom_call.1} parent=47 // pred_region
          %s1920 = smul.u32 32, %s29
          %s1922 = ssub.s32 4096, 4096
          %1923 = vsyncadd %s1913, %s1922
          %s1924 = smul.addr %s1920, 128
          %s1925 = scalar_lea.hbm %s7, %s1924
          %s1926 = sshll.u32 %s1916, 4
          %s1927 = int_to_ptr.vmem [resolvable:$true] %s1926
          %1932 = dma.vmem_to_hbm [thread:$0]  %s1927, 4096, %s1925, %s1913, 128, 128, 8
        $region76: #{tpu_custom_call.1} parent=47 // pred_fallthru
          _
      $region48: #{tpu_custom_call.1} parent=5 // pred_fallthru
        _
      %p1933 = scmp.le.s32.totalorder 2, %s20
      // Predicated region
      $region77: #{tpu_custom_call.1} parent=5 // pred_check
        %p1934 = pneg %p1933
      $region78: #{tpu_custom_call.1} parent=5 // pred_check_branch
        %1936 = sbr.rel (%p1934) target = $region80
      $region79: #{tpu_custom_call.1} parent=5 // pred_region
        %s1937 = ssub.s32 %s20, 2
        // Predicated region
        $region81: #{tpu_custom_call.1} parent=79 // pred_check
          %p1938 = pneg %p228
        $region82: #{tpu_custom_call.1} parent=79 // pred_check_branch
          %1940 = sbr.rel (%p1938) target = $region84
        $region83: #{tpu_custom_call.1} parent=79 // pred_region
          %s1941 = sand.u32 %s213, 1
          %s1942 = scalar_lea.sflag [#allocation5], %s1941
          %s1943 = sand.u32 %s213, 1
          %s1944 = smul.addr %s1943, 256
          %s1945 = scalar_lea.vmem [#allocation9], %s1944
          %1946 = dma.done %s1942, 4096
        $region84: #{tpu_custom_call.1} parent=79 // pred_fallthru
          _
      $region80: #{tpu_custom_call.1} parent=5 // pred_fallthru
        _
    $region6: #{tpu_custom_call.1} parent=1 // loop_footer
      %s24 = sadd.s32 1, %s20
    $region7: #{tpu_custom_call.1} parent=1 // loop_footer_branch
      %19 = sbr.rel target = $region3
    $region8: #{tpu_custom_call.1} parent=1 // loop_exit
      _
    %1947 = vsyncpa [#allocation4], 1
    %s1948 = scalar_lea.sflag [#allocation4], 1
    %1949 = vsyncpa %s1948, 1
    %1950 = vsyncpa [#allocation7], 1
    %1951 = vsyncpa [#allocation5], 1
    %s1952 = scalar_lea.sflag [#allocation5], 1
    %1953 = vsyncpa %s1952, 1

</llo_original>
